<compile_context>
chip_gen: v6e
topology: v6e:2x2x1
jax: 0.10.0
libtpu: 0.0.40
codegen_flags: <defaults>
</compile_context>

<pallas_src>
import jax
import jax.numpy as jnp
import numpy as np
from jax import lax
from jax.experimental import pallas as pl
from jax.experimental.pallas import tpu as pltpu


def _round_up(n, m):
    return (n + m - 1) // m * m


# ----------------------------------------------------------------------------
# Fused kernel: gru1 -> gru2 -> gru3 -> pass_on Linear -> tanh
# ----------------------------------------------------------------------------
def _autogru_fused_kernel(
        x_ref,                                     # (T, B, F) f32
        wi1_ref, wh1_ref, bi1_ref, bhn1_ref,       # (F,3H1) bf16, (H1,3H1) bf16, (1,3H1) f32, (1,H1) f32
        wi2_hbm, wh2_hbm, bi2_ref, bhn2_ref,       # bf16 HBM refs (manual DMA), (1,3H2) f32, (1,H2) f32
        wi3_ref, c3_ref,                           # (3,H2) f32 VMEM, (3,3) f32 SMEM scalars
        wlin_ref, blin_ref,                        # (B,XY) bf16, (1,XY) f32
        o_ref,                                     # (T, XY) f32
        wi2_vmem, wh2_vmem, dma_sem,               # gru2 weight landing buffers + DMA sems
        g1_scr, y1_scr, g2_scr, y2_scr,            # (T,B,3H1) (T,B,H1) (T,B,3H2) (T,B,H2) f32
        g3r_scr, g3z_scr, g3n_scr, out3_scr):      # (T,B) f32 each
    T, B, F = x_ref.shape
    H1 = y1_scr.shape[-1]
    H2 = y2_scr.shape[-1]
    f32, bf16 = jnp.float32, jnp.bfloat16
    unroll = True if T <= 8 else 8                 # partial unroll at production T

    # -- start gru2 weight DMAs now; they overlap the whole gru1 layer --------
    cp_wi2 = pltpu.make_async_copy(wi2_hbm, wi2_vmem, dma_sem.at[0])
    cp_wh2 = pltpu.make_async_copy(wh2_hbm, wh2_vmem, dma_sem.at[1])
    cp_wi2.start()
    cp_wh2.start()

    def gru_recurrence(g_scr, y_scr, wh_ref, bhn_ref, Hp):
        """Sequential part of one GRU layer; input projections already in g_scr.
        h is carried as a fori_loop value (vregs), not VMEM scratch."""
        # b_hn broadcast hoisted out of the loop (broadcast_in_dim is not CSE'd).
        bhn_b = jnp.broadcast_to(bhn_ref[...], (B, Hp))

        def step(t, h):                                            # h: (B, Hp) f32
            gi = g_scr[t]                                          # (B, 3Hp) f32
            gh = jnp.dot(h.astype(bf16), wh_ref[...],
                         preferred_element_type=f32)               # MXU, f32 acc
            r = jax.nn.sigmoid(gi[:, 0:Hp] + gh[:, 0:Hp])          # lane-aligned slices
            z = jax.nn.sigmoid(gi[:, Hp:2 * Hp] + gh[:, Hp:2 * Hp])
            n = jnp.tanh(gi[:, 2 * Hp:3 * Hp] + r * (gh[:, 2 * Hp:3 * Hp] + bhn_b))
            h_new = n + z * (h - n)                                # == (1-z)*n + z*h
            y_scr[t] = h_new
            return h_new

        lax.fori_loop(0, T, step, jnp.zeros((B, Hp), f32), unroll=unroll)

    # ---- gru1: hoisted bf16 input GEMM over all T*B rows, then recurrence ---
    x_all = x_ref[...].reshape(T * B, F).astype(bf16)
    g1 = jnp.dot(x_all, wi1_ref[...], preferred_element_type=f32) + bi1_ref[...]
    g1_scr[...] = g1.reshape(T, B, 3 * H1)
    gru_recurrence(g1_scr, y1_scr, wh1_ref, bhn1_ref, H1)

    # ---- gru2: its weights have been copying during gru1; wait just here ----
    cp_wi2.wait()
    cp_wh2.wait()
    y1_all = y1_scr[...].reshape(T * B, H1).astype(bf16)
    g2 = jnp.dot(y1_all, wi2_vmem[...], preferred_element_type=f32) + bi2_ref[...]
    g2_scr[...] = g2.reshape(T, B, 3 * H2)
    gru_recurrence(g2_scr, y2_scr, wh2_vmem, bhn2_ref, H2)

    # ---- gru3 (hidden_size = 1): VPU multiply + lane reduction, no MXU ------
    # c3_ref (SMEM) rows: 0 = W_hh scalars, 1 = b_ih, 2 = b_hh; cols = r, z, n.
    y2 = y2_scr[...]                                               # (T, B, H2) f32
    w3 = wi3_ref[...]                                              # (3, H2) rows = r,z,n
    whh_r = c3_ref[0, 0]; whh_z = c3_ref[0, 1]; whh_n = c3_ref[0, 2]
    bih_r = c3_ref[1, 0]; bih_z = c3_ref[1, 1]; bih_n = c3_ref[1, 2]
    bhh_r = c3_ref[2, 0]; bhh_z = c3_ref[2, 1]; bhh_n = c3_ref[2, 2]
    # b_hr / b_hz are purely additive with gi -> fold them into the precompute;
    # b_hn must stay inside the r*(.) term below.
    g3r_scr[...] = jnp.sum(y2 * w3[0:1, :].reshape(1, 1, H2), axis=-1) + (bih_r + bhh_r)
    g3z_scr[...] = jnp.sum(y2 * w3[1:2, :].reshape(1, 1, H2), axis=-1) + (bih_z + bhh_z)
    g3n_scr[...] = jnp.sum(y2 * w3[2:3, :].reshape(1, 1, H2), axis=-1) + bih_n

    def step3(t, h3):                                              # h3: (1, B) f32
        r = jax.nn.sigmoid(g3r_scr[pl.ds(t, 1), :] + h3 * whh_r)
        z = jax.nn.sigmoid(g3z_scr[pl.ds(t, 1), :] + h3 * whh_z)
        n = jnp.tanh(g3n_scr[pl.ds(t, 1), :] + r * (h3 * whh_n + bhh_n))
        h3n = n + z * (h3 - n)
        out3_scr[pl.ds(t, 1), :] = h3n           # lane-dense (T, B), never (T, B, 1)
        return h3n

    lax.fori_loop(0, T, step3, jnp.zeros((1, B), f32), unroll=unroll)

    # ---- pass_on Linear + tanh epilogue (fused into the same kernel) --------
    out3 = out3_scr[...]                                           # (T, B) == squeezed gru3 output
    ts = jnp.dot(out3.astype(bf16), wlin_ref[...],
                 preferred_element_type=f32) + blin_ref[...]
    o_ref[...] = jnp.tanh(ts).astype(o_ref.dtype)


def autogru_forward(spikes, params):
    """spikes: (T, B, F) with T = batch_size (recurrence axis, batch_first=False)
    and B = seq_depth.  Returns tanh(pass_on(gru stack)) of shape (T, x*y)."""
    T, B, _ = spikes.shape
    H1p = params["wh1"].shape[0]
    H2p = params["wh2"].shape[0]
    XY = params["wlin"].shape[1]

    args = (spikes,
            params["wi1"], params["wh1"], params["bi1"], params["bhn1"],
            params["wi2"], params["wh2"], params["bi2"], params["bhn2"],
            params["wi3"], params["c3"],
            params["wlin"], params["blin"])

    vmem = lambda: pl.BlockSpec(memory_space=pltpu.MemorySpace.VMEM)
    in_specs = [vmem() for _ in args]
    in_specs[5] = pl.BlockSpec(memory_space=pl.ANY)                  # wi2: manual DMA
    in_specs[6] = pl.BlockSpec(memory_space=pl.ANY)                  # wh2: manual DMA
    in_specs[10] = pl.BlockSpec(memory_space=pltpu.MemorySpace.SMEM)  # c3 scalars

    return pl.pallas_call(
        _autogru_fused_kernel,
        out_shape=jax.ShapeDtypeStruct((T, XY), jnp.float32),
        in_specs=in_specs,
        out_specs=vmem(),
        scratch_shapes=[
            pltpu.VMEM((H1p, 3 * H2p), jnp.bfloat16),   # wi2 landing buffer
            pltpu.VMEM((H2p, 3 * H2p), jnp.bfloat16),   # wh2 landing buffer
            pltpu.SemaphoreType.DMA((2,)),              # sems for the two weight DMAs
            pltpu.VMEM((T, B, 3 * H1p), jnp.float32),   # gru1 input projections
            pltpu.VMEM((T, B, H1p), jnp.float32),       # gru1 outputs
            pltpu.VMEM((T, B, 3 * H2p), jnp.float32),   # gru2 input projections
            pltpu.VMEM((T, B, H2p), jnp.float32),       # gru2 outputs
            pltpu.VMEM((T, B), jnp.float32),            # gru3 gi_r
            pltpu.VMEM((T, B), jnp.float32),            # gru3 gi_z
            pltpu.VMEM((T, B), jnp.float32),            # gru3 gi_n
            pltpu.VMEM((T, B), jnp.float32),            # gru3 outputs (squeezed)
        ],
        # Explicit scoped-VMEM limit: at the real module sizes (700->768,
        # 200->256) the bf16 weights + f32 scratch are ~7-8 MB, well inside
        # 32 MiB, but v5e's 16 MiB default is borderline with f32 weights, so
        # be explicit rather than relying on the default.
        compiler_params=pltpu.CompilerParams(vmem_limit_bytes=32 * 1024 * 1024),
    )(*args)


# ----------------------------------------------------------------------------
# Parameter init (PyTorch GRU/Linear default U(-1/sqrt(H), 1/sqrt(H))),
# plus gate-fusion, 128-lane padding, bias folding and bf16 casting.
# ----------------------------------------------------------------------------
def init_gru_params(key, in_size, hidden):
    k = 1.0 / np.sqrt(hidden)
    ks = jax.random.split(key, 4)
    u = lambda kk, shape: jax.random.uniform(kk, shape, jnp.float32, -k, k)
    return {
        "wi": u(ks[0], (in_size, 3 * hidden)),   # x @ wi ; gate order [r | z | n]
        "wh": u(ks[1], (hidden, 3 * hidden)),    # h @ wh
        "bi": u(ks[2], (3 * hidden,)),
        "bh": u(ks[3], (3 * hidden,)),
    }


def _pad_gate_cols(w, hidden, h_pad):
    """(rows, 3*hidden) -> (rows, 3*h_pad), zero-padding each gate block."""
    w = np.array(w, np.float32)
    out = np.zeros((w.shape[0], 3 * h_pad), np.float32)
    for g in range(3):
        out[:, g * h_pad:g * h_pad + hidden] = w[:, g * hidden:(g + 1) * hidden]
    return out


def fuse_and_pad_params(p1, p2, p3, wlin, blin, f, h1, h2, lane=128):
    """Lane-padded, gate-fused, bias-folded parameters consumed by the kernel.
    Matmul weights are bf16 (f32 accumulation in-kernel); biases stay f32.
    Padded hidden lanes stay exactly 0 through the recurrence (all padded
    gi/gh columns are 0, so n_pad = 0 and h_pad stays 0), so the padding is
    numerically exact."""
    h1p, h2p = _round_up(h1, lane), _round_up(h2, lane)

    def pad_layer(p, in_size, in_pad, hidden, h_pad):
        wi = np.zeros((in_pad, 3 * h_pad), np.float32)
        wi[:in_size, :] = _pad_gate_cols(p["wi"], hidden, h_pad)
        wh = np.zeros((h_pad, 3 * h_pad), np.float32)
        wh[:hidden, :] = _pad_gate_cols(p["wh"], hidden, h_pad)
        bi = np.array(p["bi"], np.float32)
        bh = np.array(p["bh"], np.float32)
        # Fold the purely-additive recurrent biases b_hr / b_hz into the input
        # bias (they end up in the precomputed gi).  b_hn must NOT be folded:
        # it sits inside the r*(.) term, so it stays as its own (1, H) vector.
        bi[:2 * hidden] += bh[:2 * hidden]
        bi_pad = _pad_gate_cols(bi.reshape(1, -1), hidden, h_pad)
        bhn_pad = np.zeros((1, h_pad), np.float32)
        bhn_pad[0, :hidden] = bh[2 * hidden:]
        return wi, wh, bi_pad, bhn_pad

    wi1, wh1, bi1, bhn1 = pad_layer(p1, f, f, h1, h1p)
    wi2, wh2, bi2, bhn2 = pad_layer(p2, h1, h1p, h2, h2p)

    # gru3 (hidden_size = 1): gate input weights as rows (3, h2p) for the
    # in-kernel lane reduction; the 9 remaining numbers go to SMEM as (3, 3).
    wi3 = np.zeros((3, h2p), np.float32)
    wi3[:, :h2] = np.array(p3["wi"], np.float32).T
    c3 = np.stack([np.array(p3["wh"], np.float32).reshape(3),
                   np.array(p3["bi"], np.float32).reshape(3),
                   np.array(p3["bh"], np.float32).reshape(3)], axis=0).astype(np.float32)

    f32 = lambda a: jnp.asarray(a, jnp.float32)
    b16 = lambda a: jnp.asarray(a, jnp.bfloat16)
    return {
        "wi1": b16(wi1), "wh1": b16(wh1), "bi1": f32(bi1), "bhn1": f32(bhn1),
        "wi2": b16(wi2), "wh2": b16(wh2), "bi2": f32(bi2), "bhn2": f32(bhn2),
        "wi3": f32(wi3), "c3": f32(c3),
        "wlin": b16(wlin), "blin": f32(np.array(blin, np.float32).reshape(1, -1)),
    }


# ----------------------------------------------------------------------------
# Pure-JAX f32 reference (lax.scan GRU) for the correctness check.
# ----------------------------------------------------------------------------
def gru_layer_ref(x, p):
    H = p["wh"].shape[0]

    def step(h, xt):
        gi = xt @ p["wi"] + p["bi"]
        gh = h @ p["wh"] + p["bh"]
        r = jax.nn.sigmoid(gi[:, :H] + gh[:, :H])
        z = jax.nn.sigmoid(gi[:, H:2 * H] + gh[:, H:2 * H])
        n = jnp.tanh(gi[:, 2 * H:] + r * gh[:, 2 * H:])
        hn = (1.0 - z) * n + z * h
        return hn, hn

    h0 = jnp.zeros((x.shape[1], H), jnp.float32)
    _, ys = jax.lax.scan(step, h0, x)
    return ys


if __name__ == "__main__":
    # Small shapes consistent with the module's forward:
    #   spikes: (batch_size, seq_depth, x + y + 1)
    BATCH = 2        # module batch_size (GRU recurrence axis, batch_first=False)
    SEQ_DEPTH = 8    # module seq_depth (GRU "batch" axis; pass_on in_features)
    X, Y = 4, 4      # module x, y
    HIDDEN = 64      # module uses 700 (-> padded 768); shrunk for the demo
    HID2 = 32        # module uses 200 (-> padded 256); shrunk for the demo
    F = X + Y + 1
    # gru3 hidden size is 1, exactly as in the module.

    key = jax.random.PRNGKey(0)
    k_spk, k1, k2, k3, k4 = jax.random.split(key, 5)
    spikes = jax.random.normal(k_spk, (BATCH, SEQ_DEPTH, F), jnp.float32)

    p1 = init_gru_params(k1, F, HIDDEN)
    p2 = init_gru_params(k2, HIDDEN, HID2)
    p3 = init_gru_params(k3, HID2, 1)
    kw, kb = jax.random.split(k4)
    klin = 1.0 / np.sqrt(SEQ_DEPTH)
    wlin = jax.random.uniform(kw, (SEQ_DEPTH, X * Y), jnp.float32, -klin, klin)
    blin = jax.random.uniform(kb, (X * Y,), jnp.float32, -klin, klin)

    fused = fuse_and_pad_params(p1, p2, p3, wlin, blin, F, HIDDEN, HID2)

    @jax.jit
    def forward(spk):
        ts = autogru_forward(spk, fused)       # (BATCH, X*Y)
        return ts.reshape(BATCH, X, Y)         # .view([batch_size, x, y])

    time_surf = forward(spikes)
    jax.block_until_ready(time_surf)

    # Correctness check against a pure-JAX f32 reference (kernel uses bf16
    # weights with f32 accumulation, hence the ~1e-2 tolerance).
    def forward_ref(spk):
        out = gru_layer_ref(spk, p1)
        out = gru_layer_ref(out, p2)
        out = gru_layer_ref(out, p3)
        # out.squeeze_(): with BATCH > 1 only gru3's hidden=1 dim drops.
        # TODO(synk): for batch_size == 1 torch's squeeze_ also drops the batch
        # dim and the original module would break at pass_on; not reproduced.
        out = jnp.squeeze(out, axis=-1)        # (BATCH, SEQ_DEPTH)
        ts = jnp.tanh(out @ wlin + blin)
        return ts.reshape(BATCH, X, Y)

    ref = forward_ref(spikes)
    np.testing.assert_allclose(np.asarray(time_surf), np.asarray(ref),
                               rtol=2e-2, atol=2e-2)
    assert time_surf.shape == (BATCH, X, Y) and time_surf.dtype == jnp.float32

    # TODO(synk): compute_loss (PIL image I/O + external p2p GAN + time_surf_module)
    # is host-side glue with no Pallas equivalent and is not part of forward().
    print("KERNEL_OK")
</pallas_src>

<mosaic_0001>
module attributes {stable_mosaic.version = 11 : i64} {
  func.func @_autogru_fused_kernel(%arg0: memref<2x8x9xf32, #tpu.memory_space<vmem>>, %arg1: memref<9x384xbf16, #tpu.memory_space<vmem>>, %arg2: memref<128x384xbf16, #tpu.memory_space<vmem>>, %arg3: memref<1x384xf32, #tpu.memory_space<vmem>>, %arg4: memref<1x128xf32, #tpu.memory_space<vmem>>, %arg5: memref<128x384xbf16, #tpu.memory_space<any>>, %arg6: memref<128x384xbf16, #tpu.memory_space<any>>, %arg7: memref<1x384xf32, #tpu.memory_space<vmem>>, %arg8: memref<1x128xf32, #tpu.memory_space<vmem>>, %arg9: memref<3x128xf32, #tpu.memory_space<vmem>>, %arg10: memref<3x3xf32, #tpu.memory_space<smem>>, %arg11: memref<8x16xbf16, #tpu.memory_space<vmem>>, %arg12: memref<1x16xf32, #tpu.memory_space<vmem>>, %arg13: memref<2x16xf32, #tpu.memory_space<vmem>>, %arg14: memref<128x384xbf16, #tpu.memory_space<vmem>>, %arg15: memref<128x384xbf16, #tpu.memory_space<vmem>>, %arg16: memref<2x!tpu.dma_semaphore, #tpu.memory_space<semaphore_mem>>, %arg17: memref<2x8x384xf32, #tpu.memory_space<vmem>>, %arg18: memref<2x8x128xf32, #tpu.memory_space<vmem>>, %arg19: memref<2x8x384xf32, #tpu.memory_space<vmem>>, %arg20: memref<2x8x128xf32, #tpu.memory_space<vmem>>, %arg21: memref<2x8xf32, #tpu.memory_space<vmem>>, %arg22: memref<2x8xf32, #tpu.memory_space<vmem>>, %arg23: memref<2x8xf32, #tpu.memory_space<vmem>>, %arg24: memref<2x8xf32, #tpu.memory_space<vmem>>) attributes {dimension_semantics = [], scalar_prefetch = 0 : i64, scratch_operands = 11 : i64, tpu.core_type = #tpu.core_type<tc>} {
    %c0_i32 = arith.constant 0 : i32
    %0 = tpu.memref_slice %arg16[%c0_i32] : memref<2x!tpu.dma_semaphore, #tpu.memory_space<semaphore_mem>> -> memref<1x!tpu.dma_semaphore, #tpu.memory_space<semaphore_mem>>
    %1 = tpu.memref_squeeze %0 : memref<1x!tpu.dma_semaphore, #tpu.memory_space<semaphore_mem>> -> memref<!tpu.dma_semaphore, #tpu.memory_space<semaphore_mem>>
    tpu.enqueue_dma source(%arg5 : memref<128x384xbf16, #tpu.memory_space<any>>) target(%arg14 : memref<128x384xbf16, #tpu.memory_space<vmem>>) target_semaphore(%1 : memref<!tpu.dma_semaphore, #tpu.memory_space<semaphore_mem>>)
    %c1_i32 = arith.constant 1 : i32
    %2 = tpu.memref_slice %arg16[%c1_i32] : memref<2x!tpu.dma_semaphore, #tpu.memory_space<semaphore_mem>> -> memref<1x!tpu.dma_semaphore, #tpu.memory_space<semaphore_mem>>
    %3 = tpu.memref_squeeze %2 : memref<1x!tpu.dma_semaphore, #tpu.memory_space<semaphore_mem>> -> memref<!tpu.dma_semaphore, #tpu.memory_space<semaphore_mem>>
    tpu.enqueue_dma source(%arg6 : memref<128x384xbf16, #tpu.memory_space<any>>) target(%arg15 : memref<128x384xbf16, #tpu.memory_space<vmem>>) target_semaphore(%3 : memref<!tpu.dma_semaphore, #tpu.memory_space<semaphore_mem>>)
    %c0 = arith.constant 0 : index
    %c0_0 = arith.constant 0 : index
    %c0_1 = arith.constant 0 : index
    %4 = vector.load %arg0[%c0, %c0_0, %c0_1] : memref<2x8x9xf32, #tpu.memory_space<vmem>>, vector<2x8x9xf32>
    %5 = vector.shape_cast %4 : vector<2x8x9xf32> to vector<16x9xf32>
    %6 = arith.truncf %5 : vector<16x9xf32> to vector<16x9xbf16>
    %c0_2 = arith.constant 0 : index
    %c0_3 = arith.constant 0 : index
    %7 = vector.load %arg1[%c0_2, %c0_3] : memref<9x384xbf16, #tpu.memory_space<vmem>>, vector<9x384xbf16>
    %cst = arith.constant dense<0.000000e+00> : vector<16x384xf32>
    %8 = tpu.matmul %6, %7, %cst {dimension_numbers = #tpu.dot_dimension_numbers<[1], [0], [0], [1], [0, 0, 1, 1], [], []>} : vector<16x9xbf16>, vector<9x384xbf16>, vector<16x384xf32> -> vector<16x384xf32>
    %c0_4 = arith.constant 0 : index
    %c0_5 = arith.constant 0 : index
    %9 = vector.load %arg3[%c0_4, %c0_5] : memref<1x384xf32, #tpu.memory_space<vmem>>, vector<1x384xf32>
    %10 = vector.broadcast %9 : vector<1x384xf32> to vector<16x384xf32>
    %11 = arith.addf %8, %10 : vector<16x384xf32>
    %12 = vector.shape_cast %11 : vector<16x384xf32> to vector<2x8x384xf32>
    %c0_6 = arith.constant 0 : index
    %c0_7 = arith.constant 0 : index
    %c0_8 = arith.constant 0 : index
    %13 = vector.load %arg17[%c0_6, %c0_7, %c0_8] : memref<2x8x384xf32, #tpu.memory_space<vmem>>, vector<2x8x384xf32>
    tpu.vector_store %arg17[%c0_6, %c0_7, %c0_8], %12 {strides = array<i32>} : memref<2x8x384xf32, #tpu.memory_space<vmem>>, vector<2x8x384xf32>,
    %c0_9 = arith.constant 0 : index
    %c0_10 = arith.constant 0 : index
    %14 = vector.load %arg4[%c0_9, %c0_10] : memref<1x128xf32, #tpu.memory_space<vmem>>, vector<1x128xf32>
    %15 = vector.shape_cast %14 : vector<1x128xf32> to vector<1x128xf32>
    %16 = vector.broadcast %15 : vector<1x128xf32> to vector<8x128xf32>
    %cst_11 = arith.constant 0.000000e+00 : f32
    %17 = vector.broadcast %cst_11 : f32 to vector<8x128xf32>
    %c0_i32_12 = arith.constant 0 : i32
    %18 = arith.index_cast %c0_i32_12 : i32 to index
    %c0_13 = arith.constant 0 : index
    %c0_14 = arith.constant 0 : index
    %19 = vector.load %arg17[%18, %c0_13, %c0_14] : memref<2x8x384xf32, #tpu.memory_space<vmem>>, vector<1x8x384xf32>
    %20 = vector.shape_cast %19 : vector<1x8x384xf32> to vector<8x384xf32>
    %21 = arith.truncf %17 : vector<8x128xf32> to vector<8x128xbf16>
    %c0_15 = arith.constant 0 : index
    %c0_16 = arith.constant 0 : index
    %22 = vector.load %arg2[%c0_15, %c0_16] : memref<128x384xbf16, #tpu.memory_space<vmem>>, vector<128x384xbf16>
    %cst_17 = arith.constant dense<0.000000e+00> : vector<8x384xf32>
    %23 = tpu.matmul %21, %22, %cst_17 {dimension_numbers = #tpu.dot_dimension_numbers<[1], [0], [0], [1], [0, 0, 1, 1], [], []>} : vector<8x128xbf16>, vector<128x384xbf16>, vector<8x384xf32> -> vector<8x384xf32>
    %24 = vector.extract_strided_slice %20 {offsets = [0, 0], sizes = [8, 128], strides = [1, 1]} : vector<8x384xf32> to vector<8x128xf32>
    %25 = vector.extract_strided_slice %23 {offsets = [0, 0], sizes = [8, 128], strides = [1, 1]} : vector<8x384xf32> to vector<8x128xf32>
    %26 = arith.addf %24, %25 : vector<8x128xf32>
    %27 = arith.negf %26 : vector<8x128xf32>
    %28 = math.exp %27 : vector<8x128xf32>
    %cst_18 = arith.constant 1.000000e+00 : f32
    %29 = vector.broadcast %cst_18 : f32 to vector<8x128xf32>
    %30 = arith.addf %29, %28 : vector<8x128xf32>
    %31 = arith.divf %29, %30 : vector<8x128xf32>
    %32 = vector.extract_strided_slice %20 {offsets = [0, 128], sizes = [8, 128], strides = [1, 1]} : vector<8x384xf32> to vector<8x128xf32>
    %33 = vector.extract_strided_slice %23 {offsets = [0, 128], sizes = [8, 128], strides = [1, 1]} : vector<8x384xf32> to vector<8x128xf32>
    %34 = arith.addf %32, %33 : vector<8x128xf32>
    %35 = arith.negf %34 : vector<8x128xf32>
    %36 = math.exp %35 : vector<8x128xf32>
    %cst_19 = arith.constant 1.000000e+00 : f32
    %37 = vector.broadcast %cst_19 : f32 to vector<8x128xf32>
    %38 = arith.addf %37, %36 : vector<8x128xf32>
    %39 = arith.divf %37, %38 : vector<8x128xf32>
    %40 = vector.extract_strided_slice %20 {offsets = [0, 256], sizes = [8, 128], strides = [1, 1]} : vector<8x384xf32> to vector<8x128xf32>
    %41 = vector.extract_strided_slice %23 {offsets = [0, 256], sizes = [8, 128], strides = [1, 1]} : vector<8x384xf32> to vector<8x128xf32>
    %42 = arith.addf %41, %16 : vector<8x128xf32>
    %43 = arith.mulf %31, %42 : vector<8x128xf32>
    %44 = arith.addf %40, %43 : vector<8x128xf32>
    %45 = math.tanh %44 : vector<8x128xf32>
    %46 = arith.subf %17, %45 : vector<8x128xf32>
    %47 = arith.mulf %39, %46 : vector<8x128xf32>
    %48 = arith.addf %45, %47 : vector<8x128xf32>
    %49 = arith.index_cast %c0_i32_12 : i32 to index
    %c0_20 = arith.constant 0 : index
    %c0_21 = arith.constant 0 : index
    %50 = vector.load %arg18[%49, %c0_20, %c0_21] : memref<2x8x128xf32, #tpu.memory_space<vmem>>, vector<1x8x128xf32>
    %51 = vector.shape_cast %50 : vector<1x8x128xf32> to vector<8x128xf32>
    %52 = vector.shape_cast %48 : vector<8x128xf32> to vector<1x8x128xf32>
    tpu.vector_store %arg18[%49, %c0_20, %c0_21], %52 {strides = array<i32>} : memref<2x8x128xf32, #tpu.memory_space<vmem>>, vector<1x8x128xf32>,
    %c1_i32_22 = arith.constant 1 : i32
    %53 = arith.index_cast %c1_i32_22 : i32 to index
    %c0_23 = arith.constant 0 : index
    %c0_24 = arith.constant 0 : index
    %54 = vector.load %arg17[%53, %c0_23, %c0_24] : memref<2x8x384xf32, #tpu.memory_space<vmem>>, vector<1x8x384xf32>
    %55 = vector.shape_cast %54 : vector<1x8x384xf32> to vector<8x384xf32>
    %56 = arith.truncf %48 : vector<8x128xf32> to vector<8x128xbf16>
    %c0_25 = arith.constant 0 : index
    %c0_26 = arith.constant 0 : index
    %57 = vector.load %arg2[%c0_25, %c0_26] : memref<128x384xbf16, #tpu.memory_space<vmem>>, vector<128x384xbf16>
    %cst_27 = arith.constant dense<0.000000e+00> : vector<8x384xf32>
    %58 = tpu.matmul %56, %57, %cst_27 {dimension_numbers = #tpu.dot_dimension_numbers<[1], [0], [0], [1], [0, 0, 1, 1], [], []>} : vector<8x128xbf16>, vector<128x384xbf16>, vector<8x384xf32> -> vector<8x384xf32>
    %59 = vector.extract_strided_slice %55 {offsets = [0, 0], sizes = [8, 128], strides = [1, 1]} : vector<8x384xf32> to vector<8x128xf32>
    %60 = vector.extract_strided_slice %58 {offsets = [0, 0], sizes = [8, 128], strides = [1, 1]} : vector<8x384xf32> to vector<8x128xf32>
    %61 = arith.addf %59, %60 : vector<8x128xf32>
    %62 = arith.negf %61 : vector<8x128xf32>
    %63 = math.exp %62 : vector<8x128xf32>
    %cst_28 = arith.constant 1.000000e+00 : f32
    %64 = vector.broadcast %cst_28 : f32 to vector<8x128xf32>
    %65 = arith.addf %64, %63 : vector<8x128xf32>
    %66 = arith.divf %64, %65 : vector<8x128xf32>
    %67 = vector.extract_strided_slice %55 {offsets = [0, 128], sizes = [8, 128], strides = [1, 1]} : vector<8x384xf32> to vector<8x128xf32>
    %68 = vector.extract_strided_slice %58 {offsets = [0, 128], sizes = [8, 128], strides = [1, 1]} : vector<8x384xf32> to vector<8x128xf32>
    %69 = arith.addf %67, %68 : vector<8x128xf32>
    %70 = arith.negf %69 : vector<8x128xf32>
    %71 = math.exp %70 : vector<8x128xf32>
    %cst_29 = arith.constant 1.000000e+00 : f32
    %72 = vector.broadcast %cst_29 : f32 to vector<8x128xf32>
    %73 = arith.addf %72, %71 : vector<8x128xf32>
    %74 = arith.divf %72, %73 : vector<8x128xf32>
    %75 = vector.extract_strided_slice %55 {offsets = [0, 256], sizes = [8, 128], strides = [1, 1]} : vector<8x384xf32> to vector<8x128xf32>
    %76 = vector.extract_strided_slice %58 {offsets = [0, 256], sizes = [8, 128], strides = [1, 1]} : vector<8x384xf32> to vector<8x128xf32>
    %77 = arith.addf %76, %16 : vector<8x128xf32>
    %78 = arith.mulf %66, %77 : vector<8x128xf32>
    %79 = arith.addf %75, %78 : vector<8x128xf32>
    %80 = math.tanh %79 : vector<8x128xf32>
    %81 = arith.subf %48, %80 : vector<8x128xf32>
    %82 = arith.mulf %74, %81 : vector<8x128xf32>
    %83 = arith.addf %80, %82 : vector<8x128xf32>
    %84 = arith.index_cast %c1_i32_22 : i32 to index
    %c0_30 = arith.constant 0 : index
    %c0_31 = arith.constant 0 : index
    %85 = vector.load %arg18[%84, %c0_30, %c0_31] : memref<2x8x128xf32, #tpu.memory_space<vmem>>, vector<1x8x128xf32>
    %86 = vector.shape_cast %85 : vector<1x8x128xf32> to vector<8x128xf32>
    %87 = vector.shape_cast %83 : vector<8x128xf32> to vector<1x8x128xf32>
    tpu.vector_store %arg18[%84, %c0_30, %c0_31], %87 {strides = array<i32>} : memref<2x8x128xf32, #tpu.memory_space<vmem>>, vector<1x8x128xf32>,
    %c2_i32 = arith.constant 2 : i32
    %c0_i32_32 = arith.constant 0 : i32
    %88 = tpu.memref_slice %arg16[%c0_i32_32] : memref<2x!tpu.dma_semaphore, #tpu.memory_space<semaphore_mem>> -> memref<1x!tpu.dma_semaphore, #tpu.memory_space<semaphore_mem>>
    %89 = tpu.memref_squeeze %88 : memref<1x!tpu.dma_semaphore, #tpu.memory_space<semaphore_mem>> -> memref<!tpu.dma_semaphore, #tpu.memory_space<semaphore_mem>>
    tpu.wait_dma2 semaphore(%89 : memref<!tpu.dma_semaphore, #tpu.memory_space<semaphore_mem>>) src(%arg5 : memref<128x384xbf16, #tpu.memory_space<any>>) dst(%arg14 : memref<128x384xbf16, #tpu.memory_space<vmem>>)
    %c1_i32_33 = arith.constant 1 : i32
    %90 = tpu.memref_slice %arg16[%c1_i32_33] : memref<2x!tpu.dma_semaphore, #tpu.memory_space<semaphore_mem>> -> memref<1x!tpu.dma_semaphore, #tpu.memory_space<semaphore_mem>>
    %91 = tpu.memref_squeeze %90 : memref<1x!tpu.dma_semaphore, #tpu.memory_space<semaphore_mem>> -> memref<!tpu.dma_semaphore, #tpu.memory_space<semaphore_mem>>
    tpu.wait_dma2 semaphore(%91 : memref<!tpu.dma_semaphore, #tpu.memory_space<semaphore_mem>>) src(%arg6 : memref<128x384xbf16, #tpu.memory_space<any>>) dst(%arg15 : memref<128x384xbf16, #tpu.memory_space<vmem>>)
    %c0_34 = arith.constant 0 : index
    %c0_35 = arith.constant 0 : index
    %c0_36 = arith.constant 0 : index
    %92 = vector.load %arg18[%c0_34, %c0_35, %c0_36] : memref<2x8x128xf32, #tpu.memory_space<vmem>>, vector<2x8x128xf32>
    %93 = vector.shape_cast %92 : vector<2x8x128xf32> to vector<16x128xf32>
    %94 = arith.truncf %93 : vector<16x128xf32> to vector<16x128xbf16>
    %c0_37 = arith.constant 0 : index
    %c0_38 = arith.constant 0 : index
    %95 = vector.load %arg14[%c0_37, %c0_38] : memref<128x384xbf16, #tpu.memory_space<vmem>>, vector<128x384xbf16>
    %cst_39 = arith.constant dense<0.000000e+00> : vector<16x384xf32>
    %96 = tpu.matmul %94, %95, %cst_39 {dimension_numbers = #tpu.dot_dimension_numbers<[1], [0], [0], [1], [0, 0, 1, 1], [], []>} : vector<16x128xbf16>, vector<128x384xbf16>, vector<16x384xf32> -> vector<16x384xf32>
    %c0_40 = arith.constant 0 : index
    %c0_41 = arith.constant 0 : index
    %97 = vector.load %arg7[%c0_40, %c0_41] : memref<1x384xf32, #tpu.memory_space<vmem>>, vector<1x384xf32>
    %98 = vector.broadcast %97 : vector<1x384xf32> to vector<16x384xf32>
    %99 = arith.addf %96, %98 : vector<16x384xf32>
    %100 = vector.shape_cast %99 : vector<16x384xf32> to vector<2x8x384xf32>
    %c0_42 = arith.constant 0 : index
    %c0_43 = arith.constant 0 : index
    %c0_44 = arith.constant 0 : index
    %101 = vector.load %arg19[%c0_42, %c0_43, %c0_44] : memref<2x8x384xf32, #tpu.memory_space<vmem>>, vector<2x8x384xf32>
    tpu.vector_store %arg19[%c0_42, %c0_43, %c0_44], %100 {strides = array<i32>} : memref<2x8x384xf32, #tpu.memory_space<vmem>>, vector<2x8x384xf32>,
    %c0_45 = arith.constant 0 : index
    %c0_46 = arith.constant 0 : index
    %102 = vector.load %arg8[%c0_45, %c0_46] : memref<1x128xf32, #tpu.memory_space<vmem>>, vector<1x128xf32>
    %103 = vector.shape_cast %102 : vector<1x128xf32> to vector<1x128xf32>
    %104 = vector.broadcast %103 : vector<1x128xf32> to vector<8x128xf32>
    %cst_47 = arith.constant 0.000000e+00 : f32
    %105 = vector.broadcast %cst_47 : f32 to vector<8x128xf32>
    %c0_i32_48 = arith.constant 0 : i32
    %106 = arith.index_cast %c0_i32_48 : i32 to index
    %c0_49 = arith.constant 0 : index
    %c0_50 = arith.constant 0 : index
    %107 = vector.load %arg19[%106, %c0_49, %c0_50] : memref<2x8x384xf32, #tpu.memory_space<vmem>>, vector<1x8x384xf32>
    %108 = vector.shape_cast %107 : vector<1x8x384xf32> to vector<8x384xf32>
    %109 = arith.truncf %105 : vector<8x128xf32> to vector<8x128xbf16>
    %c0_51 = arith.constant 0 : index
    %c0_52 = arith.constant 0 : index
    %110 = vector.load %arg15[%c0_51, %c0_52] : memref<128x384xbf16, #tpu.memory_space<vmem>>, vector<128x384xbf16>
    %cst_53 = arith.constant dense<0.000000e+00> : vector<8x384xf32>
    %111 = tpu.matmul %109, %110, %cst_53 {dimension_numbers = #tpu.dot_dimension_numbers<[1], [0], [0], [1], [0, 0, 1, 1], [], []>} : vector<8x128xbf16>, vector<128x384xbf16>, vector<8x384xf32> -> vector<8x384xf32>
    %112 = vector.extract_strided_slice %108 {offsets = [0, 0], sizes = [8, 128], strides = [1, 1]} : vector<8x384xf32> to vector<8x128xf32>
    %113 = vector.extract_strided_slice %111 {offsets = [0, 0], sizes = [8, 128], strides = [1, 1]} : vector<8x384xf32> to vector<8x128xf32>
    %114 = arith.addf %112, %113 : vector<8x128xf32>
    %115 = arith.negf %114 : vector<8x128xf32>
    %116 = math.exp %115 : vector<8x128xf32>
    %cst_54 = arith.constant 1.000000e+00 : f32
    %117 = vector.broadcast %cst_54 : f32 to vector<8x128xf32>
    %118 = arith.addf %117, %116 : vector<8x128xf32>
    %119 = arith.divf %117, %118 : vector<8x128xf32>
    %120 = vector.extract_strided_slice %108 {offsets = [0, 128], sizes = [8, 128], strides = [1, 1]} : vector<8x384xf32> to vector<8x128xf32>
    %121 = vector.extract_strided_slice %111 {offsets = [0, 128], sizes = [8, 128], strides = [1, 1]} : vector<8x384xf32> to vector<8x128xf32>
    %122 = arith.addf %120, %121 : vector<8x128xf32>
    %123 = arith.negf %122 : vector<8x128xf32>
    %124 = math.exp %123 : vector<8x128xf32>
    %cst_55 = arith.constant 1.000000e+00 : f32
    %125 = vector.broadcast %cst_55 : f32 to vector<8x128xf32>
    %126 = arith.addf %125, %124 : vector<8x128xf32>
    %127 = arith.divf %125, %126 : vector<8x128xf32>
    %128 = vector.extract_strided_slice %108 {offsets = [0, 256], sizes = [8, 128], strides = [1, 1]} : vector<8x384xf32> to vector<8x128xf32>
    %129 = vector.extract_strided_slice %111 {offsets = [0, 256], sizes = [8, 128], strides = [1, 1]} : vector<8x384xf32> to vector<8x128xf32>
    %130 = arith.addf %129, %104 : vector<8x128xf32>
    %131 = arith.mulf %119, %130 : vector<8x128xf32>
    %132 = arith.addf %128, %131 : vector<8x128xf32>
    %133 = math.tanh %132 : vector<8x128xf32>
    %134 = arith.subf %105, %133 : vector<8x128xf32>
    %135 = arith.mulf %127, %134 : vector<8x128xf32>
    %136 = arith.addf %133, %135 : vector<8x128xf32>
    %137 = arith.index_cast %c0_i32_48 : i32 to index
    %c0_56 = arith.constant 0 : index
    %c0_57 = arith.constant 0 : index
    %138 = vector.load %arg20[%137, %c0_56, %c0_57] : memref<2x8x128xf32, #tpu.memory_space<vmem>>, vector<1x8x128xf32>
    %139 = vector.shape_cast %138 : vector<1x8x128xf32> to vector<8x128xf32>
    %140 = vector.shape_cast %136 : vector<8x128xf32> to vector<1x8x128xf32>
    tpu.vector_store %arg20[%137, %c0_56, %c0_57], %140 {strides = array<i32>} : memref<2x8x128xf32, #tpu.memory_space<vmem>>, vector<1x8x128xf32>,
    %c1_i32_58 = arith.constant 1 : i32
    %141 = arith.index_cast %c1_i32_58 : i32 to index
    %c0_59 = arith.constant 0 : index
    %c0_60 = arith.constant 0 : index
    %142 = vector.load %arg19[%141, %c0_59, %c0_60] : memref<2x8x384xf32, #tpu.memory_space<vmem>>, vector<1x8x384xf32>
    %143 = vector.shape_cast %142 : vector<1x8x384xf32> to vector<8x384xf32>
    %144 = arith.truncf %136 : vector<8x128xf32> to vector<8x128xbf16>
    %c0_61 = arith.constant 0 : index
    %c0_62 = arith.constant 0 : index
    %145 = vector.load %arg15[%c0_61, %c0_62] : memref<128x384xbf16, #tpu.memory_space<vmem>>, vector<128x384xbf16>
    %cst_63 = arith.constant dense<0.000000e+00> : vector<8x384xf32>
    %146 = tpu.matmul %144, %145, %cst_63 {dimension_numbers = #tpu.dot_dimension_numbers<[1], [0], [0], [1], [0, 0, 1, 1], [], []>} : vector<8x128xbf16>, vector<128x384xbf16>, vector<8x384xf32> -> vector<8x384xf32>
    %147 = vector.extract_strided_slice %143 {offsets = [0, 0], sizes = [8, 128], strides = [1, 1]} : vector<8x384xf32> to vector<8x128xf32>
    %148 = vector.extract_strided_slice %146 {offsets = [0, 0], sizes = [8, 128], strides = [1, 1]} : vector<8x384xf32> to vector<8x128xf32>
    %149 = arith.addf %147, %148 : vector<8x128xf32>
    %150 = arith.negf %149 : vector<8x128xf32>
    %151 = math.exp %150 : vector<8x128xf32>
    %cst_64 = arith.constant 1.000000e+00 : f32
    %152 = vector.broadcast %cst_64 : f32 to vector<8x128xf32>
    %153 = arith.addf %152, %151 : vector<8x128xf32>
    %154 = arith.divf %152, %153 : vector<8x128xf32>
    %155 = vector.extract_strided_slice %143 {offsets = [0, 128], sizes = [8, 128], strides = [1, 1]} : vector<8x384xf32> to vector<8x128xf32>
    %156 = vector.extract_strided_slice %146 {offsets = [0, 128], sizes = [8, 128], strides = [1, 1]} : vector<8x384xf32> to vector<8x128xf32>
    %157 = arith.addf %155, %156 : vector<8x128xf32>
    %158 = arith.negf %157 : vector<8x128xf32>
    %159 = math.exp %158 : vector<8x128xf32>
    %cst_65 = arith.constant 1.000000e+00 : f32
    %160 = vector.broadcast %cst_65 : f32 to vector<8x128xf32>
    %161 = arith.addf %160, %159 : vector<8x128xf32>
    %162 = arith.divf %160, %161 : vector<8x128xf32>
    %163 = vector.extract_strided_slice %143 {offsets = [0, 256], sizes = [8, 128], strides = [1, 1]} : vector<8x384xf32> to vector<8x128xf32>
    %164 = vector.extract_strided_slice %146 {offsets = [0, 256], sizes = [8, 128], strides = [1, 1]} : vector<8x384xf32> to vector<8x128xf32>
    %165 = arith.addf %164, %104 : vector<8x128xf32>
    %166 = arith.mulf %154, %165 : vector<8x128xf32>
    %167 = arith.addf %163, %166 : vector<8x128xf32>
    %168 = math.tanh %167 : vector<8x128xf32>
    %169 = arith.subf %136, %168 : vector<8x128xf32>
    %170 = arith.mulf %162, %169 : vector<8x128xf32>
    %171 = arith.addf %168, %170 : vector<8x128xf32>
    %172 = arith.index_cast %c1_i32_58 : i32 to index
    %c0_66 = arith.constant 0 : index
    %c0_67 = arith.constant 0 : index
    %173 = vector.load %arg20[%172, %c0_66, %c0_67] : memref<2x8x128xf32, #tpu.memory_space<vmem>>, vector<1x8x128xf32>
    %174 = vector.shape_cast %173 : vector<1x8x128xf32> to vector<8x128xf32>
    %175 = vector.shape_cast %171 : vector<8x128xf32> to vector<1x8x128xf32>
    tpu.vector_store %arg20[%172, %c0_66, %c0_67], %175 {strides = array<i32>} : memref<2x8x128xf32, #tpu.memory_space<vmem>>, vector<1x8x128xf32>,
    %c2_i32_68 = arith.constant 2 : i32
    %c0_69 = arith.constant 0 : index
    %c0_70 = arith.constant 0 : index
    %c0_71 = arith.constant 0 : index
    %176 = vector.load %arg20[%c0_69, %c0_70, %c0_71] : memref<2x8x128xf32, #tpu.memory_space<vmem>>, vector<2x8x128xf32>
    %c0_72 = arith.constant 0 : index
    %c0_73 = arith.constant 0 : index
    %177 = vector.load %arg9[%c0_72, %c0_73] : memref<3x128xf32, #tpu.memory_space<vmem>>, vector<3x128xf32>
    %c0_74 = arith.constant 0 : index
    %c0_75 = arith.constant 0 : index
    %178 = memref.load %arg10[%c0_74, %c0_75] : memref<3x3xf32, #tpu.memory_space<smem>>
    %c0_76 = arith.constant 0 : index
    %c1 = arith.constant 1 : index
    %179 = memref.load %arg10[%c0_76, %c1] : memref<3x3xf32, #tpu.memory_space<smem>>
    %c0_77 = arith.constant 0 : index
    %c2 = arith.constant 2 : index
    %180 = memref.load %arg10[%c0_77, %c2] : memref<3x3xf32, #tpu.memory_space<smem>>
    %c1_78 = arith.constant 1 : index
    %c0_79 = arith.constant 0 : index
    %181 = memref.load %arg10[%c1_78, %c0_79] : memref<3x3xf32, #tpu.memory_space<smem>>
    %c1_80 = arith.constant 1 : index
    %c1_81 = arith.constant 1 : index
    %182 = memref.load %arg10[%c1_80, %c1_81] : memref<3x3xf32, #tpu.memory_space<smem>>
    %c1_82 = arith.constant 1 : index
    %c2_83 = arith.constant 2 : index
    %183 = memref.load %arg10[%c1_82, %c2_83] : memref<3x3xf32, #tpu.memory_space<smem>>
    %c2_84 = arith.constant 2 : index
    %c0_85 = arith.constant 0 : index
    %184 = memref.load %arg10[%c2_84, %c0_85] : memref<3x3xf32, #tpu.memory_space<smem>>
    %c2_86 = arith.constant 2 : index
    %c1_87 = arith.constant 1 : index
    %185 = memref.load %arg10[%c2_86, %c1_87] : memref<3x3xf32, #tpu.memory_space<smem>>
    %c2_88 = arith.constant 2 : index
    %c2_89 = arith.constant 2 : index
    %186 = memref.load %arg10[%c2_88, %c2_89] : memref<3x3xf32, #tpu.memory_space<smem>>
    %187 = vector.extract_strided_slice %177 {offsets = [0, 0], sizes = [1, 128], strides = [1, 1]} : vector<3x128xf32> to vector<1x128xf32>
    %188 = vector.shape_cast %187 : vector<1x128xf32> to vector<1x1x128xf32>
    %189 = vector.broadcast %188 : vector<1x1x128xf32> to vector<2x8x128xf32>
    %190 = arith.mulf %176, %189 : vector<2x8x128xf32>
    %cst_90 = arith.constant dense<0.000000e+00> : vector<2x8xf32>
    %191 = vector.multi_reduction <add>, %190, %cst_90 [2] : vector<2x8x128xf32> to vector<2x8xf32>
    %192 = arith.addf %181, %184 : f32
    %193 = vector.broadcast %192 : f32 to vector<2x8xf32>
    %194 = arith.addf %191, %193 : vector<2x8xf32>
    %c0_91 = arith.constant 0 : index
    %c0_92 = arith.constant 0 : index
    %195 = vector.load %arg21[%c0_91, %c0_92] : memref<2x8xf32, #tpu.memory_space<vmem>>, vector<2x8xf32>
    tpu.vector_store %arg21[%c0_91, %c0_92], %194 {strides = array<i32>} : memref<2x8xf32, #tpu.memory_space<vmem>>, vector<2x8xf32>,
    %196 = vector.extract_strided_slice %177 {offsets = [1, 0], sizes = [1, 128], strides = [1, 1]} : vector<3x128xf32> to vector<1x128xf32>
    %197 = vector.shape_cast %196 : vector<1x128xf32> to vector<1x1x128xf32>
    %198 = vector.broadcast %197 : vector<1x1x128xf32> to vector<2x8x128xf32>
    %199 = arith.mulf %176, %198 : vector<2x8x128xf32>
    %cst_93 = arith.constant dense<0.000000e+00> : vector<2x8xf32>
    %200 = vector.multi_reduction <add>, %199, %cst_93 [2] : vector<2x8x128xf32> to vector<2x8xf32>
    %201 = arith.addf %182, %185 : f32
    %202 = vector.broadcast %201 : f32 to vector<2x8xf32>
    %203 = arith.addf %200, %202 : vector<2x8xf32>
    %c0_94 = arith.constant 0 : index
    %c0_95 = arith.constant 0 : index
    %204 = vector.load %arg22[%c0_94, %c0_95] : memref<2x8xf32, #tpu.memory_space<vmem>>, vector<2x8xf32>
    tpu.vector_store %arg22[%c0_94, %c0_95], %203 {strides = array<i32>} : memref<2x8xf32, #tpu.memory_space<vmem>>, vector<2x8xf32>,
    %205 = vector.extract_strided_slice %177 {offsets = [2, 0], sizes = [1, 128], strides = [1, 1]} : vector<3x128xf32> to vector<1x128xf32>
    %206 = vector.shape_cast %205 : vector<1x128xf32> to vector<1x1x128xf32>
    %207 = vector.broadcast %206 : vector<1x1x128xf32> to vector<2x8x128xf32>
    %208 = arith.mulf %176, %207 : vector<2x8x128xf32>
    %cst_96 = arith.constant dense<0.000000e+00> : vector<2x8xf32>
    %209 = vector.multi_reduction <add>, %208, %cst_96 [2] : vector<2x8x128xf32> to vector<2x8xf32>
    %210 = vector.broadcast %183 : f32 to vector<2x8xf32>
    %211 = arith.addf %209, %210 : vector<2x8xf32>
    %c0_97 = arith.constant 0 : index
    %c0_98 = arith.constant 0 : index
    %212 = vector.load %arg23[%c0_97, %c0_98] : memref<2x8xf32, #tpu.memory_space<vmem>>, vector<2x8xf32>
    tpu.vector_store %arg23[%c0_97, %c0_98], %211 {strides = array<i32>} : memref<2x8xf32, #tpu.memory_space<vmem>>, vector<2x8xf32>,
    %cst_99 = arith.constant 0.000000e+00 : f32
    %213 = vector.broadcast %cst_99 : f32 to vector<1x8xf32>
    %c0_i32_100 = arith.constant 0 : i32
    %214 = arith.index_cast %c0_i32_100 : i32 to index
    %c0_101 = arith.constant 0 : index
    %215 = vector.load %arg21[%214, %c0_101] : memref<2x8xf32, #tpu.memory_space<vmem>>, vector<1x8xf32>
    %216 = vector.broadcast %178 : f32 to vector<1x8xf32>
    %217 = arith.mulf %213, %216 : vector<1x8xf32>
    %218 = arith.addf %215, %217 : vector<1x8xf32>
    %219 = arith.negf %218 : vector<1x8xf32>
    %220 = math.exp %219 : vector<1x8xf32>
    %cst_102 = arith.constant 1.000000e+00 : f32
    %221 = vector.broadcast %cst_102 : f32 to vector<1x8xf32>
    %222 = arith.addf %221, %220 : vector<1x8xf32>
    %223 = arith.divf %221, %222 : vector<1x8xf32>
    %224 = arith.index_cast %c0_i32_100 : i32 to index
    %c0_103 = arith.constant 0 : index
    %225 = vector.load %arg22[%224, %c0_103] : memref<2x8xf32, #tpu.memory_space<vmem>>, vector<1x8xf32>
    %226 = vector.broadcast %179 : f32 to vector<1x8xf32>
    %227 = arith.mulf %213, %226 : vector<1x8xf32>
    %228 = arith.addf %225, %227 : vector<1x8xf32>
    %229 = arith.negf %228 : vector<1x8xf32>
    %230 = math.exp %229 : vector<1x8xf32>
    %cst_104 = arith.constant 1.000000e+00 : f32
    %231 = vector.broadcast %cst_104 : f32 to vector<1x8xf32>
    %232 = arith.addf %231, %230 : vector<1x8xf32>
    %233 = arith.divf %231, %232 : vector<1x8xf32>
    %234 = arith.index_cast %c0_i32_100 : i32 to index
    %c0_105 = arith.constant 0 : index
    %235 = vector.load %arg23[%234, %c0_105] : memref<2x8xf32, #tpu.memory_space<vmem>>, vector<1x8xf32>
    %236 = vector.broadcast %180 : f32 to vector<1x8xf32>
    %237 = arith.mulf %213, %236 : vector<1x8xf32>
    %238 = vector.broadcast %186 : f32 to vector<1x8xf32>
    %239 = arith.addf %237, %238 : vector<1x8xf32>
    %240 = arith.mulf %223, %239 : vector<1x8xf32>
    %241 = arith.addf %235, %240 : vector<1x8xf32>
    %242 = math.tanh %241 : vector<1x8xf32>
    %243 = arith.subf %213, %242 : vector<1x8xf32>
    %244 = arith.mulf %233, %243 : vector<1x8xf32>
    %245 = arith.addf %242, %244 : vector<1x8xf32>
    %246 = arith.index_cast %c0_i32_100 : i32 to index
    %c0_106 = arith.constant 0 : index
    %247 = vector.load %arg24[%246, %c0_106] : memref<2x8xf32, #tpu.memory_space<vmem>>, vector<1x8xf32>
    tpu.vector_store %arg24[%246, %c0_106], %245 {strides = array<i32>} : memref<2x8xf32, #tpu.memory_space<vmem>>, vector<1x8xf32>,
    %c1_i32_107 = arith.constant 1 : i32
    %248 = arith.index_cast %c1_i32_107 : i32 to index
    %c0_108 = arith.constant 0 : index
    %249 = vector.load %arg21[%248, %c0_108] : memref<2x8xf32, #tpu.memory_space<vmem>>, vector<1x8xf32>
    %250 = vector.broadcast %178 : f32 to vector<1x8xf32>
    %251 = arith.mulf %245, %250 : vector<1x8xf32>
    %252 = arith.addf %249, %251 : vector<1x8xf32>
    %253 = arith.negf %252 : vector<1x8xf32>
    %254 = math.exp %253 : vector<1x8xf32>
    %cst_109 = arith.constant 1.000000e+00 : f32
    %255 = vector.broadcast %cst_109 : f32 to vector<1x8xf32>
    %256 = arith.addf %255, %254 : vector<1x8xf32>
    %257 = arith.divf %255, %256 : vector<1x8xf32>
    %258 = arith.index_cast %c1_i32_107 : i32 to index
    %c0_110 = arith.constant 0 : index
    %259 = vector.load %arg22[%258, %c0_110] : memref<2x8xf32, #tpu.memory_space<vmem>>, vector<1x8xf32>
    %260 = vector.broadcast %179 : f32 to vector<1x8xf32>
    %261 = arith.mulf %245, %260 : vector<1x8xf32>
    %262 = arith.addf %259, %261 : vector<1x8xf32>
    %263 = arith.negf %262 : vector<1x8xf32>
    %264 = math.exp %263 : vector<1x8xf32>
    %cst_111 = arith.constant 1.000000e+00 : f32
    %265 = vector.broadcast %cst_111 : f32 to vector<1x8xf32>
    %266 = arith.addf %265, %264 : vector<1x8xf32>
    %267 = arith.divf %265, %266 : vector<1x8xf32>
    %268 = arith.index_cast %c1_i32_107 : i32 to index
    %c0_112 = arith.constant 0 : index
    %269 = vector.load %arg23[%268, %c0_112] : memref<2x8xf32, #tpu.memory_space<vmem>>, vector<1x8xf32>
    %270 = vector.broadcast %180 : f32 to vector<1x8xf32>
    %271 = arith.mulf %245, %270 : vector<1x8xf32>
    %272 = vector.broadcast %186 : f32 to vector<1x8xf32>
    %273 = arith.addf %271, %272 : vector<1x8xf32>
    %274 = arith.mulf %257, %273 : vector<1x8xf32>
    %275 = arith.addf %269, %274 : vector<1x8xf32>
    %276 = math.tanh %275 : vector<1x8xf32>
    %277 = arith.subf %245, %276 : vector<1x8xf32>
    %278 = arith.mulf %267, %277 : vector<1x8xf32>
    %279 = arith.addf %276, %278 : vector<1x8xf32>
    %280 = arith.index_cast %c1_i32_107 : i32 to index
    %c0_113 = arith.constant 0 : index
    %281 = vector.load %arg24[%280, %c0_113] : memref<2x8xf32, #tpu.memory_space<vmem>>, vector<1x8xf32>
    tpu.vector_store %arg24[%280, %c0_113], %279 {strides = array<i32>} : memref<2x8xf32, #tpu.memory_space<vmem>>, vector<1x8xf32>,
    %c2_i32_114 = arith.constant 2 : i32
    %c0_115 = arith.constant 0 : index
    %c0_116 = arith.constant 0 : index
    %282 = vector.load %arg24[%c0_115, %c0_116] : memref<2x8xf32, #tpu.memory_space<vmem>>, vector<2x8xf32>
    %283 = arith.truncf %282 : vector<2x8xf32> to vector<2x8xbf16>
    %c0_117 = arith.constant 0 : index
    %c0_118 = arith.constant 0 : index
    %284 = vector.load %arg11[%c0_117, %c0_118] : memref<8x16xbf16, #tpu.memory_space<vmem>>, vector<8x16xbf16>
    %cst_119 = arith.constant dense<0.000000e+00> : vector<2x16xf32>
    %285 = tpu.matmul %283, %284, %cst_119 {dimension_numbers = #tpu.dot_dimension_numbers<[1], [0], [0], [1], [0, 0, 1, 1], [], []>} : vector<2x8xbf16>, vector<8x16xbf16>, vector<2x16xf32> -> vector<2x16xf32>
    %c0_120 = arith.constant 0 : index
    %c0_121 = arith.constant 0 : index
    %286 = vector.load %arg12[%c0_120, %c0_121] : memref<1x16xf32, #tpu.memory_space<vmem>>, vector<1x16xf32>
    %287 = vector.broadcast %286 : vector<1x16xf32> to vector<2x16xf32>
    %288 = arith.addf %285, %287 : vector<2x16xf32>
    %289 = math.tanh %288 : vector<2x16xf32>
    %c0_122 = arith.constant 0 : index
    %c0_123 = arith.constant 0 : index
    %290 = vector.load %arg13[%c0_122, %c0_123] : memref<2x16xf32, #tpu.memory_space<vmem>>, vector<2x16xf32>
    tpu.vector_store %arg13[%c0_122, %c0_123], %289 {strides = array<i32>} : memref<2x16xf32, #tpu.memory_space<vmem>>, vector<2x16xf32>,
    return
  }
}

</mosaic_0001>

<llo_original>
// kernel: forward.1
$region0: #{forward.1}
  #allocation0 [shape = 'u32[]', space=smem, size = 0x4, offset = 0x4, fixed_abs, tag = 'smem constant byte address 0x4 - core index']
  #allocation1 [shape = 'u32[144,128]{1,0:T(1,128)}', space=vmem, size = 0x12000, scoped, tag = 'internal scratch']
  #allocation2 [shape = 'bf16[128,384]{1,0:T(8,128)(2,1)}', space=vmem, size = 0x18000, scoped, tag = 'scratch operand']
  #allocation3 [shape = 'bf16[128,384]{1,0:T(8,128)(2,1)}', space=vmem, size = 0x18000, scoped, tag = 'scratch operand']
  #allocation4 [shape = 's32[2]{0}', space=sflag, size = 0x8, scoped, tag = 'scratch operand']
  #allocation5 [shape = 'f32[2,8,384]{2,1,0:T(8,128)}', space=vmem, size = 0x6000, scoped, tag = 'scratch operand']
  #allocation6 [shape = 'f32[2,8,128]{2,1,0:T(8,128)}', space=vmem, size = 0x2000, scoped, tag = 'scratch operand']
  #allocation7 [shape = 'f32[2,8,384]{2,1,0:T(8,128)}', space=vmem, size = 0x6000, scoped, tag = 'scratch operand']
  #allocation8 [shape = 'f32[2,8,128]{2,1,0:T(8,128)}', space=vmem, size = 0x2000, scoped, tag = 'scratch operand']
  #allocation9 [shape = 'f32[2,8]{1,0:T(2,128)}', space=vmem, size = 0x400, scoped, tag = 'scratch operand']
  #allocation10 [shape = 'f32[2,8]{1,0:T(2,128)}', space=vmem, size = 0x400, scoped, tag = 'scratch operand']
  #allocation11 [shape = 'f32[2,8]{1,0:T(2,128)}', space=vmem, size = 0x400, scoped, tag = 'scratch operand']
  #allocation12 [shape = 'f32[2,8]{1,0:T(2,128)}', space=vmem, size = 0x400, scoped, tag = 'scratch operand']
  #allocation25 [shape = 's32[]', space=sflag, size = 0x4, offset = 0, fixed_abs, tag = 'sflag constant byte address 0x0 - dummy sync flag']
  #allocation26 [shape = 's32[]', space=sflag, size = 0x4, offset = 0, fixed_abs, tag = 'sflag constant byte address 0x0 - dummy sync flag']
  #allocation27 [shape = 'u32[]', space=smem, size = 0x4, offset = 0x44, fixed_abs, tag = 'smem constant byte address 0x44 - assertion arg 0']
  #allocation28 [shape = 'u32[]', space=smem, size = 0x4, offset = 0x48, fixed_abs, tag = 'smem constant byte address 0x48 - assertion arg 1']
  #allocation29 [shape = 's32[]', space=sflag, size = 0x4, offset = 0, fixed_abs, tag = 'sflag constant byte address 0x0 - dummy sync flag']
  #allocation30 [shape = 's32[]', space=sflag, size = 0x4, offset = 0, fixed_abs, tag = 'sflag constant byte address 0x0 - dummy sync flag']
  %s0 = inlined_call_operand.hbm [shape: f32[2,8,9], index: 0, kind: input, shape index: {}]
  %s1 = inlined_call_operand.hbm [shape: bf16[9,384], index: 1, kind: input, shape index: {}]
  %s2 = inlined_call_operand.hbm [shape: bf16[128,384], index: 2, kind: input, shape index: {}]
  %s3 = inlined_call_operand.hbm [shape: f32[1,384], index: 3, kind: input, shape index: {}]
  %s4 = inlined_call_operand.hbm [shape: f32[1,128], index: 4, kind: input, shape index: {}]
  %s5 = inlined_call_operand.hbm [shape: bf16[128,384], index: 5, kind: input, shape index: {}]
  %s6 = inlined_call_operand.hbm [shape: bf16[128,384], index: 6, kind: input, shape index: {}]
  %s7 = inlined_call_operand.hbm [shape: f32[1,384], index: 7, kind: input, shape index: {}]
  %s8 = inlined_call_operand.vmem [shape: f32[1,128], index: 8, kind: input, shape index: {}]
  %s9 = inlined_call_operand.vmem [shape: f32[3,128], index: 9, kind: input, shape index: {}]
  %s10 = inlined_call_operand.vmem [shape: f32[3,3], index: 10, kind: input, shape index: {}]
  %s11 = inlined_call_operand.vmem [shape: bf16[8,16], index: 11, kind: input, shape index: {}]
  %s12 = inlined_call_operand.vmem [shape: f32[1,16], index: 12, kind: input, shape index: {}]
  %s13 = inlined_call_operand.vmem [shape: f32[2,16], index: 13, kind: output, shape index: {}]
  %s14 = sld [smem:[#allocation0]]
  $region90: #{forward.1} parent=0
    _
  %s16 = ssub.s32 1, %s14
  %s17 = scalar_select 0, %s16, %s14
  $region1: #{forward.1} parent=0
    #allocation13 [shape = 'u8[8192]{0}', space=vmem, size = 0x2000, scoped, tag = 'input window, operand 0, single buffered']
    #allocation14 [shape = 's32[1]{0}', space=sflag, size = 0x4, scoped, tag = 'scoped memory for forward.1']
    #allocation15 [shape = 's32[1]{0}', space=sflag, size = 0x4, scoped, tag = 'scoped memory for forward.1']
    #allocation16 [shape = 'u8[12288]{0}', space=vmem, size = 0x3000, scoped, tag = 'input window, operand 1, single buffered']
    #allocation17 [shape = 's32[1]{0}', space=sflag, size = 0x4, scoped, tag = 'scoped memory for forward.1']
    #allocation18 [shape = 'u8[98304]{0}', space=vmem, size = 0x18000, scoped, tag = 'input window, operand 2, single buffered']
    #allocation19 [shape = 'u8[1536]{0}', space=vmem, size = 0x800, scoped, tag = 'input window, operand 3, single buffered']
    #allocation20 [shape = 's32[1]{0}', space=sflag, size = 0x4, scoped, tag = 'scoped memory for forward.1']
    #allocation21 [shape = 'u8[512]{0}', space=vmem, size = 0x400, scoped, tag = 'input window, operand 4, single buffered']
    #allocation22 [shape = 'u8[1536]{0}', space=vmem, size = 0x800, scoped, tag = 'input window, operand 7, single buffered']
    #allocation23 [shape = 's32[1]{0}', space=sflag, size = 0x4, scoped, tag = 'scoped memory for forward.1']
    #allocation24 [shape = 'u8[2048]{0}', space=smem, size = 0x800, scoped, tag = 'input window, operand 10, single buffered']
    %18 = vsyncpa [#allocation14], 0
    %19 = vsyncpa [#allocation17], 0
    %20 = vsyncpa [#allocation20], 0
    %21 = vsyncpa [#allocation23], 0
    %22 = vsyncpa [#allocation15], 0
    // Predicated region
    $region2: #{forward.1} parent=1 // pred_check
      _
    $region3: #{forward.1} parent=1 // pred_check_branch
      %24 = sbr.rel (0) target = $region5
    $region4: #{forward.1} parent=1 // pred_region
      %s26 = ssub.s32 256, 256
      %27 = vsyncadd [#allocation14], %s26
      %s28 = sshll.u32 [#allocation13], 4
      %s29 = int_to_ptr.vmem [resolvable:$true] %s28
      %34 = dma.hbm_to_vmem [thread:$0]  %s0, 256, %s29, [#allocation14], 128, 128, 8
    $region5: #{forward.1} parent=1 // pred_fallthru
      _
    // Predicated region
    $region6: #{forward.1} parent=1 // pred_check
      _
    $region7: #{forward.1} parent=1 // pred_check_branch
      %36 = sbr.rel (0) target = $region9
    $region8: #{forward.1} parent=1 // pred_region
      %s38 = ssub.s32 384, 384
      %39 = vsyncadd [#allocation17], %s38
      %s40 = sshll.u32 [#allocation16], 4
      %s41 = int_to_ptr.vmem [resolvable:$true] %s40
      %46 = dma.hbm_to_vmem [thread:$0]  %s1, 384, %s41, [#allocation17], 192, 192, 12
    $region9: #{forward.1} parent=1 // pred_fallthru
      _
    // Predicated region
    $region10: #{forward.1} parent=1 // pred_check
      _
    $region11: #{forward.1} parent=1 // pred_check_branch
      %48 = sbr.rel (0) target = $region13
    $region12: #{forward.1} parent=1 // pred_region
      %s50 = ssub.s32 3072, 3072
      %51 = vsyncadd [#allocation17], %s50
      %s52 = sshll.u32 [#allocation18], 4
      %s53 = int_to_ptr.vmem [resolvable:$true] %s52
      %58 = dma.hbm_to_vmem [thread:$0]  %s2, 3072, %s53, [#allocation17], 192, 192, 12
    $region13: #{forward.1} parent=1 // pred_fallthru
      _
    // Predicated region
    $region14: #{forward.1} parent=1 // pred_check
      _
    $region15: #{forward.1} parent=1 // pred_check_branch
      %60 = sbr.rel (0) target = $region17
    $region16: #{forward.1} parent=1 // pred_region
      %s62 = ssub.s32 48, 48
      %63 = vsyncadd [#allocation20], %s62
      %s65 = sshll.u32 [#allocation19], 4
      %s66 = int_to_ptr.vmem [resolvable:$true] %s65
      %68 = dma.hbm_to_vmem [thread:$0]  %s3, 48, %s66, [#allocation20]
    $region17: #{forward.1} parent=1 // pred_fallthru
      _
    // Predicated region
    $region18: #{forward.1} parent=1 // pred_check
      _
    $region19: #{forward.1} parent=1 // pred_check_branch
      %70 = sbr.rel (0) target = $region21
    $region20: #{forward.1} parent=1 // pred_region
      %s72 = ssub.s32 16, 16
      %73 = vsyncadd [#allocation20], %s72
      %s75 = sshll.u32 [#allocation21], 4
      %s76 = int_to_ptr.vmem [resolvable:$true] %s75
      %78 = dma.hbm_to_vmem [thread:$0]  %s4, 16, %s76, [#allocation20]
    $region21: #{forward.1} parent=1 // pred_fallthru
      _
    // Predicated region
    $region22: #{forward.1} parent=1 // pred_check
      _
    $region23: #{forward.1} parent=1 // pred_check_branch
      %80 = sbr.rel (0) target = $region25
    $region24: #{forward.1} parent=1 // pred_region
      %s82 = ssub.s32 48, 48
      %83 = vsyncadd [#allocation23], %s82
      %s85 = sshll.u32 [#allocation22], 4
      %s86 = int_to_ptr.vmem [resolvable:$true] %s85
      %88 = dma.hbm_to_vmem [thread:$0]  %s7, 48, %s86, [#allocation23]
    $region25: #{forward.1} parent=1 // pred_fallthru
      _
    // Predicated region
    $region26: #{forward.1} parent=1 // pred_check
      _
    $region27: #{forward.1} parent=1 // pred_check_branch
      %90 = sbr.rel (0) target = $region29
    $region28: #{forward.1} parent=1 // pred_region
      _
    $region29: #{forward.1} parent=1 // pred_fallthru
      _
    // Predicated region
    $region30: #{forward.1} parent=1 // pred_check
      _
    $region31: #{forward.1} parent=1 // pred_check_branch
      %92 = sbr.rel (0) target = $region33
    $region32: #{forward.1} parent=1 // pred_region
      _
    $region33: #{forward.1} parent=1 // pred_fallthru
      _
    // Predicated region
    $region34: #{forward.1} parent=1 // pred_check
      _
    $region35: #{forward.1} parent=1 // pred_check_branch
      %94 = sbr.rel (0) target = $region37
    $region36: #{forward.1} parent=1 // pred_region
      %s96 = ssub.s32 64, 64
      %97 = vsyncadd [#allocation15], %s96
      %s99 = sshll.u32 %s10, 4
      %s100 = int_to_ptr.vmem [resolvable:$true] %s99
      %102 = dma.vmem_to_smem %s100, 64, [#allocation24], [#allocation15]
    $region37: #{forward.1} parent=1 // pred_fallthru
      _
    // Predicated region
    $region38: #{forward.1} parent=1 // pred_check
      _
    $region39: #{forward.1} parent=1 // pred_check_branch
      %104 = sbr.rel (0) target = $region41
    $region40: #{forward.1} parent=1 // pred_region
      _
    $region41: #{forward.1} parent=1 // pred_fallthru
      _
    // Predicated region
    $region42: #{forward.1} parent=1 // pred_check
      _
    $region43: #{forward.1} parent=1 // pred_check_branch
      %106 = sbr.rel (0) target = $region45
    $region44: #{forward.1} parent=1 // pred_region
      _
    $region45: #{forward.1} parent=1 // pred_fallthru
      _
    // Predicated region
    $region46: #{forward.1} parent=1 // pred_check
      _
    $region47: #{forward.1} parent=1 // pred_check_branch
      %108 = sbr.rel (0) target = $region49
    $region48: #{forward.1} parent=1 // pred_region
      %109 = dma.done [#allocation14], 256
    $region49: #{forward.1} parent=1 // pred_fallthru
      _
    // Predicated region
    $region50: #{forward.1} parent=1 // pred_check
      _
    $region51: #{forward.1} parent=1 // pred_check_branch
      %111 = sbr.rel (0) target = $region53
    $region52: #{forward.1} parent=1 // pred_region
      %112 = dma.done [#allocation17], 384
    $region53: #{forward.1} parent=1 // pred_fallthru
      _
    // Predicated region
    $region54: #{forward.1} parent=1 // pred_check
      _
    $region55: #{forward.1} parent=1 // pred_check_branch
      %114 = sbr.rel (0) target = $region57
    $region56: #{forward.1} parent=1 // pred_region
      %115 = dma.done [#allocation17], 3072
    $region57: #{forward.1} parent=1 // pred_fallthru
      _
    // Predicated region
    $region58: #{forward.1} parent=1 // pred_check
      _
    $region59: #{forward.1} parent=1 // pred_check_branch
      %117 = sbr.rel (0) target = $region61
    $region60: #{forward.1} parent=1 // pred_region
      %118 = dma.done [#allocation20], 48
    $region61: #{forward.1} parent=1 // pred_fallthru
      _
    // Predicated region
    $region62: #{forward.1} parent=1 // pred_check
      _
    $region63: #{forward.1} parent=1 // pred_check_branch
      %120 = sbr.rel (0) target = $region65
    $region64: #{forward.1} parent=1 // pred_region
      %121 = dma.done [#allocation20], 16
    $region65: #{forward.1} parent=1 // pred_fallthru
      _
    // Predicated region
    $region66: #{forward.1} parent=1 // pred_check
      _
    $region67: #{forward.1} parent=1 // pred_check_branch
      %123 = sbr.rel (0) target = $region69
    $region68: #{forward.1} parent=1 // pred_region
      %124 = dma.done [#allocation23], 48
    $region69: #{forward.1} parent=1 // pred_fallthru
      _
    // Predicated region
    $region70: #{forward.1} parent=1 // pred_check
      _
    $region71: #{forward.1} parent=1 // pred_check_branch
      %126 = sbr.rel (0) target = $region73
    $region72: #{forward.1} parent=1 // pred_region
      %127 = dma.done [#allocation15], 64
    $region73: #{forward.1} parent=1 // pred_fallthru
      _
    %128 = sfence
    // Predicated region
    $region74: #{forward.1} parent=1 // pred_check
      _
    $region75: #{forward.1} parent=1 // pred_check_branch
      %131 = sbr.rel target = $region77
    $region76: #{forward.1} parent=1 // pred_region
      %132 = sst [smem:[#allocation27]] [#allocation26]
      %133 = sst [smem:[#allocation28]] [#allocation25]
    $region77: #{forward.1} parent=1 // pred_fallthru
      _
    %135 = shalt.err (0)
    %s137 = sshll.u32 [#allocation2], 4
    %s138 = int_to_ptr.vmem [resolvable:$true] %s137
    %140 = dma.hbm_to_vmem [thread:$0]  %s5, 3072, %s138, [#allocation4]
    %s141 = scalar_lea.sflag [#allocation4], 1
    // Predicated region
    $region78: #{forward.1} parent=1 // pred_check
      _
    $region79: #{forward.1} parent=1 // pred_check_branch
      %143 = sbr.rel target = $region81
    $region80: #{forward.1} parent=1 // pred_region
      %144 = sst [smem:[#allocation27]] [#allocation30]
      %145 = sst [smem:[#allocation28]] [#allocation29]
    $region81: #{forward.1} parent=1 // pred_fallthru
      _
    %147 = shalt.err (0)
    %s149 = sshll.u32 [#allocation3], 4
    %s150 = int_to_ptr.vmem [resolvable:$true] %s149
    %152 = dma.hbm_to_vmem [thread:$0]  %s6, 3072, %s150, %s141
    %v153 = vld [vmem:[#allocation13] sm:$0xff]
    %v154 = vld [vmem:[#allocation13 + $0x8] sm:$0xff]
    %v155 = vpack.c.bf16 %v154, %v153
    %v156 = vld [vmem:[#allocation16] sm:$0xff]
    %v157 = vld [vmem:[#allocation16 + $0x8] sm:$0xf]
    %v158 = vld [vmem:[#allocation16 + $0xc] sm:$0x11]
    %v159 = vld [vmem:[#allocation16 + $0x14] sm:$0x1]
    %v160 = vld [vmem:[#allocation19] sm:$0x7]
    %v162 = vlaneseq
    %v163 = vshrl.u32 %v162, 7
    %v164 = vsub.s32 0, %v163
    %v165 = vrot.slane %v160, %v164
    %v166 = vlaneseq
    %v167 = vshrl.u32 %v166, 7
    %v168 = vsub.s32 1, %v167
    %v169 = vrot.slane %v160, %v168
    %v170 = vlaneseq
    %v171 = vshrl.u32 %v170, 7
    %v172 = vsub.s32 2, %v171
    %v173 = vrot.slane %v160, %v172
    %v181 = vunpack.c.l.b16 %v156
    %v182 = vunpack.c.h.b16 %v156
    %v183 = vunpack.c.l.b16 %v157
    %v184 = vunpack.c.l.b16 %v158
    %v185 = vunpack.c.h.b16 %v158
    %v186 = vunpack.c.l.b16 %v159
    %v187 = vpack.c.b16 %v184, %v181
    %v188 = vpack.c.b16 %v185, %v182
    %v189 = vpack.c.b16 %v186, %v183
    %vm190 = vcmask 72704
    %v192 = vsel %vm190, %v155, 0
    %vm194 = vcmask 1043456
    %vm195 = vcmask 1044480
    %v196 = vsel %vm194, 4294967295, 65535
    %v197 = vsel %vm195, %v196, 0
    %v199 = vand.u32 %v187, %v197
    %v202 = vand.u32 %v188, %v197
    %v205 = vand.u32 %v189, %v197
    %207 = vmatprep.subr.bf16.mxu0 0
    %208 = vmatpush1.bf16.msra.mxu0 0
    %209 = vmatprep.subr.bf16.mxu0 0
    %210 = vmatpush1.bf16.msra.mxu0 0
    %211 = vmatprep.subr.bf16.mxu0 0
    %212 = vmatpush1.bf16.msra.mxu0 0
    %213 = vmatprep.subr.bf16.mxu0 0
    %214 = vmatpush1.bf16.msra.mxu0 0
    %215 = vmatprep.subr.bf16.mxu0 0
    %216 = vmatpush1.bf16.msra.mxu0 0
    %217 = vmatprep.subr.bf16.mxu0 0
    %218 = vmatpush1.bf16.msra.mxu0 0
    %219 = vmatprep.subr.bf16.mxu0 0
    %220 = vmatpush1.bf16.msra.mxu0 0
    %221 = vmatprep.subr.bf16.mxu0 %v202
    %222 = vmatpush1.bf16.msra.mxu0 %v199
    %223 = vmatprep.subr.bf16.mxu0 0
    %224 = vmatpush2.bf16.msra.mxu0 0
    %225 = vmatprep.subr.bf16.mxu0 0
    %226 = vmatpush2.bf16.msra.mxu0 0
    %227 = vmatprep.subr.bf16.mxu0 0
    %228 = vmatpush2.bf16.msra.mxu0 0
    %229 = vmatprep.subr.bf16.mxu0 0
    %230 = vmatpush2.bf16.msra.mxu0 0
    %231 = vmatprep.subr.bf16.mxu0 0
    %232 = vmatpush2.bf16.msra.mxu0 0
    %233 = vmatprep.subr.bf16.mxu0 0
    %234 = vmatpush2.bf16.msra.mxu0 0
    %235 = vmatprep.subr.bf16.mxu0 0
    %236 = vmatpush2.bf16.msra.mxu0 0
    %237 = vmatprep.subr.bf16.mxu0 0
    %238 = vmatpush2.bf16.msra.mxu0 0
    %239 = vmatprep.mubr.bf16.mxu0 0
    %240 = vmatmul.mubr.bf16.gmra.mxu0 %v192
    %v241 = vpop.f32.mrf.mxu0
    %v242 = vadd.f32 %v165, %v241
    %v243 = vpop.f32.mrf.mxu0
    %v244 = vadd.f32 %v169, %v243
    %v245 = vpop.f32.mrf.mxu0
    %v246 = vadd.f32 %v165, %v245
    %v247 = vpop.f32.mrf.mxu0
    %v248 = vadd.f32 %v169, %v247
    %249 = vdwg.mxu0
    %250 = vmatprep.subr.bf16.mxu0 0
    %251 = vmatpush1.bf16.msra.mxu0 0
    %252 = vmatprep.subr.bf16.mxu0 0
    %253 = vmatpush1.bf16.msra.mxu0 0
    %254 = vmatprep.subr.bf16.mxu0 0
    %255 = vmatpush1.bf16.msra.mxu0 0
    %256 = vmatprep.subr.bf16.mxu0 0
    %257 = vmatpush1.bf16.msra.mxu0 0
    %258 = vmatprep.subr.bf16.mxu0 0
    %259 = vmatpush1.bf16.msra.mxu0 0
    %260 = vmatprep.subr.bf16.mxu0 0
    %261 = vmatpush1.bf16.msra.mxu0 0
    %262 = vmatprep.subr.bf16.mxu0 0
    %263 = vmatpush1.bf16.msra.mxu0 0
    %264 = vmatprep.subr.bf16.mxu0 0
    %265 = vmatpush1.bf16.msra.mxu0 %v205
    %266 = vmatprep.subr.bf16.mxu0 0
    %267 = vmatpush2.bf16.msra.mxu0 0
    %268 = vmatprep.subr.bf16.mxu0 0
    %269 = vmatpush2.bf16.msra.mxu0 0
    %270 = vmatprep.subr.bf16.mxu0 0
    %271 = vmatpush2.bf16.msra.mxu0 0
    %272 = vmatprep.subr.bf16.mxu0 0
    %273 = vmatpush2.bf16.msra.mxu0 0
    %274 = vmatprep.subr.bf16.mxu0 0
    %275 = vmatpush2.bf16.msra.mxu0 0
    %276 = vmatprep.subr.bf16.mxu0 0
    %277 = vmatpush2.bf16.msra.mxu0 0
    %278 = vmatprep.subr.bf16.mxu0 0
    %279 = vmatpush2.bf16.msra.mxu0 0
    %280 = vmatprep.subr.bf16.mxu0 0
    %281 = vmatpush2.bf16.msra.mxu0 0
    %282 = vmatprep.mubr.bf16.mxu0 0
    %283 = vmatmul.mubr.bf16.gmra.mxu0 %v192
    %v284 = vpop.f32.mrf.mxu0
    %v285 = vadd.f32 %v173, %v284
    %v286 = vpop.f32.mrf.mxu0
    %v287 = vpop.f32.mrf.mxu0
    %v288 = vadd.f32 %v173, %v287
    %v289 = vpop.f32.mrf.mxu0
    %290 = vdwg.mxu0
    %291 = vst [vmem:[#allocation5] sm:$0xff] %v242
    %292 = vst [vmem:[#allocation5 + $0x8] sm:$0xff] %v244
    %293 = vst [vmem:[#allocation5 + $0x10] sm:$0xff] %v285
    %294 = vst [vmem:[#allocation5 + $0x18] sm:$0xff] %v246
    %295 = vst [vmem:[#allocation5 + $0x20] sm:$0xff] %v248
    %296 = vst [vmem:[#allocation5 + $0x28] sm:$0xff] %v288
    %v297 = vld [vmem:[#allocation21] sm:$0x1]
    %v299 = vlaneseq
    %v300 = vshrl.u32 %v299, 7
    %v301 = vsub.s32 0, %v300
    %v302 = vrot.slane %v297, %v301
    %v304 = vld [vmem:[#allocation5] sm:$0xff]
    %v305 = vld [vmem:[#allocation5 + $0x8] sm:$0xff]
    %v306 = vld [vmem:[#allocation5 + $0x10] sm:$0xff]
    %v307 = vld [vmem:[#allocation18] sm:$0xff]
    %v308 = vld [vmem:[#allocation18 + $0x8] sm:$0xf]
    %v309 = vld [vmem:[#allocation18 + $0xc] sm:$0xff]
    %v310 = vld [vmem:[#allocation18 + $0x14] sm:$0xf]
    %v311 = vld [vmem:[#allocation18 + $0x18] sm:$0xff]
    %v312 = vld [vmem:[#allocation18 + $0x20] sm:$0xf]
    %v313 = vld [vmem:[#allocation18 + $0x24] sm:$0xff]
    %v314 = vld [vmem:[#allocation18 + $0x2c] sm:$0xf]
    %v315 = vld [vmem:[#allocation18 + $0x30] sm:$0xff]
    %v316 = vld [vmem:[#allocation18 + $0x38] sm:$0xf]
    %v317 = vld [vmem:[#allocation18 + $0x3c] sm:$0xff]
    %v318 = vld [vmem:[#allocation18 + $0x44] sm:$0xf]
    %v319 = vld [vmem:[#allocation18 + $0x48] sm:$0xff]
    %v320 = vld [vmem:[#allocation18 + $0x50] sm:$0xf]
    %v321 = vld [vmem:[#allocation18 + $0x54] sm:$0xff]
    %v322 = vld [vmem:[#allocation18 + $0x5c] sm:$0xf]
    %v323 = vld [vmem:[#allocation18 + $0x60] sm:$0xff]
    %v324 = vld [vmem:[#allocation18 + $0x68] sm:$0xf]
    %v325 = vld [vmem:[#allocation18 + $0x6c] sm:$0xff]
    %v326 = vld [vmem:[#allocation18 + $0x74] sm:$0xf]
    %v327 = vld [vmem:[#allocation18 + $0x78] sm:$0xff]
    %v328 = vld [vmem:[#allocation18 + $0x80] sm:$0xf]
    %v329 = vld [vmem:[#allocation18 + $0x84] sm:$0xff]
    %v330 = vld [vmem:[#allocation18 + $0x8c] sm:$0xf]
    %v331 = vld [vmem:[#allocation18 + $0x90] sm:$0xff]
    %v332 = vld [vmem:[#allocation18 + $0x98] sm:$0xf]
    %v333 = vld [vmem:[#allocation18 + $0x9c] sm:$0xff]
    %v334 = vld [vmem:[#allocation18 + $0xa4] sm:$0xf]
    %v335 = vld [vmem:[#allocation18 + $0xa8] sm:$0xff]
    %v336 = vld [vmem:[#allocation18 + $0xb0] sm:$0xf]
    %v337 = vld [vmem:[#allocation18 + $0xb4] sm:$0xff]
    %v338 = vld [vmem:[#allocation18 + $0xbc] sm:$0xf]
    %v371 = vunpack.c.l.b16 %v307
    %v372 = vunpack.c.h.b16 %v307
    %v373 = vunpack.c.l.b16 %v308
    %v374 = vunpack.c.l.b16 %v309
    %v375 = vunpack.c.h.b16 %v309
    %v376 = vunpack.c.l.b16 %v310
    %v377 = vunpack.c.l.b16 %v311
    %v378 = vunpack.c.h.b16 %v311
    %v379 = vunpack.c.l.b16 %v312
    %v380 = vunpack.c.l.b16 %v313
    %v381 = vunpack.c.h.b16 %v313
    %v382 = vunpack.c.l.b16 %v314
    %v383 = vunpack.c.l.b16 %v315
    %v384 = vunpack.c.h.b16 %v315
    %v385 = vunpack.c.l.b16 %v316
    %v386 = vunpack.c.l.b16 %v317
    %v387 = vunpack.c.h.b16 %v317
    %v388 = vunpack.c.l.b16 %v318
    %v389 = vunpack.c.l.b16 %v319
    %v390 = vunpack.c.h.b16 %v319
    %v391 = vunpack.c.l.b16 %v320
    %v392 = vunpack.c.l.b16 %v321
    %v393 = vunpack.c.h.b16 %v321
    %v394 = vunpack.c.l.b16 %v322
    %v395 = vunpack.c.l.b16 %v323
    %v396 = vunpack.c.h.b16 %v323
    %v397 = vunpack.c.l.b16 %v324
    %v398 = vunpack.c.l.b16 %v325
    %v399 = vunpack.c.h.b16 %v325
    %v400 = vunpack.c.l.b16 %v326
    %v401 = vunpack.c.l.b16 %v327
    %v402 = vunpack.c.h.b16 %v327
    %v403 = vunpack.c.l.b16 %v328
    %v404 = vunpack.c.l.b16 %v329
    %v405 = vunpack.c.h.b16 %v329
    %v406 = vunpack.c.l.b16 %v330
    %v407 = vunpack.c.l.b16 %v331
    %v408 = vunpack.c.h.b16 %v331
    %v409 = vunpack.c.l.b16 %v332
    %v410 = vunpack.c.l.b16 %v333
    %v411 = vunpack.c.h.b16 %v333
    %v412 = vunpack.c.l.b16 %v334
    %v413 = vunpack.c.l.b16 %v335
    %v414 = vunpack.c.h.b16 %v335
    %v415 = vunpack.c.l.b16 %v336
    %v416 = vunpack.c.l.b16 %v337
    %v417 = vunpack.c.h.b16 %v337
    %v418 = vunpack.c.l.b16 %v338
    %v419 = vpack.c.b16 %v374, %v371
    %v420 = vpack.c.b16 %v375, %v372
    %v421 = vpack.c.b16 %v376, %v373
    %v422 = vpack.c.b16 %v380, %v377
    %v423 = vpack.c.b16 %v381, %v378
    %v424 = vpack.c.b16 %v382, %v379
    %v425 = vpack.c.b16 %v386, %v383
    %v426 = vpack.c.b16 %v387, %v384
    %v427 = vpack.c.b16 %v388, %v385
    %v428 = vpack.c.b16 %v392, %v389
    %v429 = vpack.c.b16 %v393, %v390
    %v430 = vpack.c.b16 %v394, %v391
    %v431 = vpack.c.b16 %v398, %v395
    %v432 = vpack.c.b16 %v399, %v396
    %v433 = vpack.c.b16 %v400, %v397
    %v434 = vpack.c.b16 %v404, %v401
    %v435 = vpack.c.b16 %v405, %v402
    %v436 = vpack.c.b16 %v406, %v403
    %v437 = vpack.c.b16 %v410, %v407
    %v438 = vpack.c.b16 %v411, %v408
    %v439 = vpack.c.b16 %v412, %v409
    %v440 = vpack.c.b16 %v416, %v413
    %v441 = vpack.c.b16 %v417, %v414
    %v442 = vpack.c.b16 %v418, %v415
    %467 = vmatprep.subr.bf16.mxu0 %v441
    %468 = vmatpush1.bf16.msra.mxu0 %v440
    %469 = vmatprep.subr.bf16.mxu0 %v438
    %470 = vmatpush1.bf16.msra.mxu0 %v437
    %471 = vmatprep.subr.bf16.mxu0 %v435
    %472 = vmatpush1.bf16.msra.mxu0 %v434
    %473 = vmatprep.subr.bf16.mxu0 %v432
    %474 = vmatpush1.bf16.msra.mxu0 %v431
    %475 = vmatprep.subr.bf16.mxu0 %v429
    %476 = vmatpush1.bf16.msra.mxu0 %v428
    %477 = vmatprep.subr.bf16.mxu0 %v426
    %478 = vmatpush1.bf16.msra.mxu0 %v425
    %479 = vmatprep.subr.bf16.mxu0 %v423
    %480 = vmatpush1.bf16.msra.mxu0 %v422
    %481 = vmatprep.subr.bf16.mxu0 %v420
    %482 = vmatpush1.bf16.msra.mxu0 %v419
    %483 = vmatprep.subr.bf16.mxu0 0
    %484 = vmatpush2.bf16.msra.mxu0 0
    %485 = vmatprep.subr.bf16.mxu0 0
    %486 = vmatpush2.bf16.msra.mxu0 0
    %487 = vmatprep.subr.bf16.mxu0 0
    %488 = vmatpush2.bf16.msra.mxu0 0
    %489 = vmatprep.subr.bf16.mxu0 0
    %490 = vmatpush2.bf16.msra.mxu0 0
    %491 = vmatprep.subr.bf16.mxu0 0
    %492 = vmatpush2.bf16.msra.mxu0 0
    %493 = vmatprep.subr.bf16.mxu0 0
    %494 = vmatpush2.bf16.msra.mxu0 0
    %495 = vmatprep.subr.bf16.mxu0 0
    %496 = vmatpush2.bf16.msra.mxu0 0
    %497 = vmatprep.subr.bf16.mxu0 0
    %498 = vmatpush2.bf16.msra.mxu0 0
    %499 = vmatprep.mubr.bf16.mxu0 0
    %500 = vmatmul.mubr.bf16.gmra.mxu0 0
    %v501 = vpop.f32.mrf.mxu0
    %v502 = vadd.f32 0.0, %v501
    %v503 = vpop.f32.mrf.mxu0
    %v504 = vadd.f32 0.0, %v503
    %v505 = vpop.f32.mrf.mxu0
    %v506 = vpop.f32.mrf.mxu0
    %507 = vdwg.mxu0
    %508 = vmatprep.subr.bf16.mxu0 0
    %509 = vmatpush1.bf16.msra.mxu0 %v442
    %510 = vmatprep.subr.bf16.mxu0 0
    %511 = vmatpush1.bf16.msra.mxu0 %v439
    %512 = vmatprep.subr.bf16.mxu0 0
    %513 = vmatpush1.bf16.msra.mxu0 %v436
    %514 = vmatprep.subr.bf16.mxu0 0
    %515 = vmatpush1.bf16.msra.mxu0 %v433
    %516 = vmatprep.subr.bf16.mxu0 0
    %517 = vmatpush1.bf16.msra.mxu0 %v430
    %518 = vmatprep.subr.bf16.mxu0 0
    %519 = vmatpush1.bf16.msra.mxu0 %v427
    %520 = vmatprep.subr.bf16.mxu0 0
    %521 = vmatpush1.bf16.msra.mxu0 %v424
    %522 = vmatprep.subr.bf16.mxu0 0
    %523 = vmatpush1.bf16.msra.mxu0 %v421
    %524 = vmatprep.subr.bf16.mxu0 0
    %525 = vmatpush2.bf16.msra.mxu0 0
    %526 = vmatprep.subr.bf16.mxu0 0
    %527 = vmatpush2.bf16.msra.mxu0 0
    %528 = vmatprep.subr.bf16.mxu0 0
    %529 = vmatpush2.bf16.msra.mxu0 0
    %530 = vmatprep.subr.bf16.mxu0 0
    %531 = vmatpush2.bf16.msra.mxu0 0
    %532 = vmatprep.subr.bf16.mxu0 0
    %533 = vmatpush2.bf16.msra.mxu0 0
    %534 = vmatprep.subr.bf16.mxu0 0
    %535 = vmatpush2.bf16.msra.mxu0 0
    %536 = vmatprep.subr.bf16.mxu0 0
    %537 = vmatpush2.bf16.msra.mxu0 0
    %538 = vmatprep.subr.bf16.mxu0 0
    %539 = vmatpush2.bf16.msra.mxu0 0
    %540 = vmatprep.mubr.bf16.mxu0 0
    %541 = vmatmul.mubr.bf16.gmra.mxu0 0
    %v542 = vpop.f32.mrf.mxu0
    %v543 = vadd.f32 0.0, %v542
    %v544 = vpop.f32.mrf.mxu0
    %v545 = vpop.f32.mrf.mxu0
    %v546 = vpop.f32.mrf.mxu0
    %547 = vdwg.mxu0
    %v548 = vadd.f32 %v304, %v502
    %v549 = vxor.u32 %v548, 2147483648
    %v550 = vmul.f32 %v549, 1.442695
    %v551 = vpow.pop %v550
    %v552 = vadd.f32 %v551, 1.0
    %v553 = vrcp.pop %v552
    %v554 = vmul.f32 1.0, %v553
    %v555 = vadd.f32 %v305, %v504
    %v556 = vxor.u32 %v555, 2147483648
    %v557 = vmul.f32 %v556, 1.442695
    %v558 = vpow.pop %v557
    %v559 = vadd.f32 %v558, 1.0
    %v560 = vrcp.pop %v559
    %v561 = vmul.f32 1.0, %v560
    %v562 = vadd.f32 %v543, %v302
    %v563 = vmul.f32 %v554, %v562
    %v564 = vadd.f32 %v306, %v563
    %v565 = vtanh.pop %v564
    %v566 = vsub.f32 0.0, %v565
    %v567 = vmul.f32 %v561, %v566
    %v568 = vadd.f32 %v565, %v567
    %569 = vst [vmem:[#allocation6] sm:$0xff] %v568
    %s570 = scalar_lea.vmem [#allocation5], 24
    %v571 = vld [vmem:[%s570] sm:$0xff]
    %v572 = vld [vmem:[%s570 + $0x8] sm:$0xff]
    %v573 = vld [vmem:[%s570 + $0x10] sm:$0xff]
    %v574 = vpack.c.bf16 %v568, %v568
    %v575 = vld [vmem:[#allocation18] sm:$0xff]
    %v576 = vld [vmem:[#allocation18 + $0x8] sm:$0xf]
    %v577 = vld [vmem:[#allocation18 + $0xc] sm:$0xff]
    %v578 = vld [vmem:[#allocation18 + $0x14] sm:$0xf]
    %v579 = vld [vmem:[#allocation18 + $0x18] sm:$0xff]
    %v580 = vld [vmem:[#allocation18 + $0x20] sm:$0xf]
    %v581 = vld [vmem:[#allocation18 + $0x24] sm:$0xff]
    %v582 = vld [vmem:[#allocation18 + $0x2c] sm:$0xf]
    %v583 = vld [vmem:[#allocation18 + $0x30] sm:$0xff]
    %v584 = vld [vmem:[#allocation18 + $0x38] sm:$0xf]
    %v585 = vld [vmem:[#allocation18 + $0x3c] sm:$0xff]
    %v586 = vld [vmem:[#allocation18 + $0x44] sm:$0xf]
    %v587 = vld [vmem:[#allocation18 + $0x48] sm:$0xff]
    %v588 = vld [vmem:[#allocation18 + $0x50] sm:$0xf]
    %v589 = vld [vmem:[#allocation18 + $0x54] sm:$0xff]
    %v590 = vld [vmem:[#allocation18 + $0x5c] sm:$0xf]
    %v591 = vld [vmem:[#allocation18 + $0x60] sm:$0xff]
    %v592 = vld [vmem:[#allocation18 + $0x68] sm:$0xf]
    %v593 = vld [vmem:[#allocation18 + $0x6c] sm:$0xff]
    %v594 = vld [vmem:[#allocation18 + $0x74] sm:$0xf]
    %v595 = vld [vmem:[#allocation18 + $0x78] sm:$0xff]
    %v596 = vld [vmem:[#allocation18 + $0x80] sm:$0xf]
    %v597 = vld [vmem:[#allocation18 + $0x84] sm:$0xff]
    %v598 = vld [vmem:[#allocation18 + $0x8c] sm:$0xf]
    %v599 = vld [vmem:[#allocation18 + $0x90] sm:$0xff]
    %v600 = vld [vmem:[#allocation18 + $0x98] sm:$0xf]
    %v601 = vld [vmem:[#allocation18 + $0x9c] sm:$0xff]
    %v602 = vld [vmem:[#allocation18 + $0xa4] sm:$0xf]
    %v603 = vld [vmem:[#allocation18 + $0xa8] sm:$0xff]
    %v604 = vld [vmem:[#allocation18 + $0xb0] sm:$0xf]
    %v605 = vld [vmem:[#allocation18 + $0xb4] sm:$0xff]
    %v606 = vld [vmem:[#allocation18 + $0xbc] sm:$0xf]
    %v639 = vunpack.c.l.b16 %v575
    %v640 = vunpack.c.h.b16 %v575
    %v641 = vunpack.c.l.b16 %v576
    %v642 = vunpack.c.l.b16 %v577
    %v643 = vunpack.c.h.b16 %v577
    %v644 = vunpack.c.l.b16 %v578
    %v645 = vunpack.c.l.b16 %v579
    %v646 = vunpack.c.h.b16 %v579
    %v647 = vunpack.c.l.b16 %v580
    %v648 = vunpack.c.l.b16 %v581
    %v649 = vunpack.c.h.b16 %v581
    %v650 = vunpack.c.l.b16 %v582
    %v651 = vunpack.c.l.b16 %v583
    %v652 = vunpack.c.h.b16 %v583
    %v653 = vunpack.c.l.b16 %v584
    %v654 = vunpack.c.l.b16 %v585
    %v655 = vunpack.c.h.b16 %v585
    %v656 = vunpack.c.l.b16 %v586
    %v657 = vunpack.c.l.b16 %v587
    %v658 = vunpack.c.h.b16 %v587
    %v659 = vunpack.c.l.b16 %v588
    %v660 = vunpack.c.l.b16 %v589
    %v661 = vunpack.c.h.b16 %v589
    %v662 = vunpack.c.l.b16 %v590
    %v663 = vunpack.c.l.b16 %v591
    %v664 = vunpack.c.h.b16 %v591
    %v665 = vunpack.c.l.b16 %v592
    %v666 = vunpack.c.l.b16 %v593
    %v667 = vunpack.c.h.b16 %v593
    %v668 = vunpack.c.l.b16 %v594
    %v669 = vunpack.c.l.b16 %v595
    %v670 = vunpack.c.h.b16 %v595
    %v671 = vunpack.c.l.b16 %v596
    %v672 = vunpack.c.l.b16 %v597
    %v673 = vunpack.c.h.b16 %v597
    %v674 = vunpack.c.l.b16 %v598
    %v675 = vunpack.c.l.b16 %v599
    %v676 = vunpack.c.h.b16 %v599
    %v677 = vunpack.c.l.b16 %v600
    %v678 = vunpack.c.l.b16 %v601
    %v679 = vunpack.c.h.b16 %v601
    %v680 = vunpack.c.l.b16 %v602
    %v681 = vunpack.c.l.b16 %v603
    %v682 = vunpack.c.h.b16 %v603
    %v683 = vunpack.c.l.b16 %v604
    %v684 = vunpack.c.l.b16 %v605
    %v685 = vunpack.c.h.b16 %v605
    %v686 = vunpack.c.l.b16 %v606
    %v687 = vpack.c.b16 %v642, %v639
    %v688 = vpack.c.b16 %v643, %v640
    %v689 = vpack.c.b16 %v644, %v641
    %v690 = vpack.c.b16 %v648, %v645
    %v691 = vpack.c.b16 %v649, %v646
    %v692 = vpack.c.b16 %v650, %v647
    %v693 = vpack.c.b16 %v654, %v651
    %v694 = vpack.c.b16 %v655, %v652
    %v695 = vpack.c.b16 %v656, %v653
    %v696 = vpack.c.b16 %v660, %v657
    %v697 = vpack.c.b16 %v661, %v658
    %v698 = vpack.c.b16 %v662, %v659
    %v699 = vpack.c.b16 %v666, %v663
    %v700 = vpack.c.b16 %v667, %v664
    %v701 = vpack.c.b16 %v668, %v665
    %v702 = vpack.c.b16 %v672, %v669
    %v703 = vpack.c.b16 %v673, %v670
    %v704 = vpack.c.b16 %v674, %v671
    %v705 = vpack.c.b16 %v678, %v675
    %v706 = vpack.c.b16 %v679, %v676
    %v707 = vpack.c.b16 %v680, %v677
    %v708 = vpack.c.b16 %v684, %v681
    %v709 = vpack.c.b16 %v685, %v682
    %v710 = vpack.c.b16 %v686, %v683
    %735 = vmatprep.subr.bf16.mxu0 %v709
    %736 = vmatpush1.bf16.msra.mxu0 %v708
    %737 = vmatprep.subr.bf16.mxu0 %v706
    %738 = vmatpush1.bf16.msra.mxu0 %v705
    %739 = vmatprep.subr.bf16.mxu0 %v703
    %740 = vmatpush1.bf16.msra.mxu0 %v702
    %741 = vmatprep.subr.bf16.mxu0 %v700
    %742 = vmatpush1.bf16.msra.mxu0 %v699
    %743 = vmatprep.subr.bf16.mxu0 %v697
    %744 = vmatpush1.bf16.msra.mxu0 %v696
    %745 = vmatprep.subr.bf16.mxu0 %v694
    %746 = vmatpush1.bf16.msra.mxu0 %v693
    %747 = vmatprep.subr.bf16.mxu0 %v691
    %748 = vmatpush1.bf16.msra.mxu0 %v690
    %749 = vmatprep.subr.bf16.mxu0 %v688
    %750 = vmatpush1.bf16.msra.mxu0 %v687
    %751 = vmatprep.subr.bf16.mxu0 0
    %752 = vmatpush2.bf16.msra.mxu0 0
    %753 = vmatprep.subr.bf16.mxu0 0
    %754 = vmatpush2.bf16.msra.mxu0 0
    %755 = vmatprep.subr.bf16.mxu0 0
    %756 = vmatpush2.bf16.msra.mxu0 0
    %757 = vmatprep.subr.bf16.mxu0 0
    %758 = vmatpush2.bf16.msra.mxu0 0
    %759 = vmatprep.subr.bf16.mxu0 0
    %760 = vmatpush2.bf16.msra.mxu0 0
    %761 = vmatprep.subr.bf16.mxu0 0
    %762 = vmatpush2.bf16.msra.mxu0 0
    %763 = vmatprep.subr.bf16.mxu0 0
    %764 = vmatpush2.bf16.msra.mxu0 0
    %765 = vmatprep.subr.bf16.mxu0 0
    %766 = vmatpush2.bf16.msra.mxu0 0
    %767 = vmatprep.mubr.bf16.mxu0 0
    %768 = vmatmul.mubr.bf16.gmra.mxu0 %v574
    %v769 = vpop.f32.mrf.mxu0
    %v770 = vadd.f32 0.0, %v769
    %v771 = vpop.f32.mrf.mxu0
    %v772 = vadd.f32 0.0, %v771
    %v773 = vpop.f32.mrf.mxu0
    %v774 = vpop.f32.mrf.mxu0
    %775 = vdwg.mxu0
    %776 = vmatprep.subr.bf16.mxu0 0
    %777 = vmatpush1.bf16.msra.mxu0 %v710
    %778 = vmatprep.subr.bf16.mxu0 0
    %779 = vmatpush1.bf16.msra.mxu0 %v707
    %780 = vmatprep.subr.bf16.mxu0 0
    %781 = vmatpush1.bf16.msra.mxu0 %v704
    %782 = vmatprep.subr.bf16.mxu0 0
    %783 = vmatpush1.bf16.msra.mxu0 %v701
    %784 = vmatprep.subr.bf16.mxu0 0
    %785 = vmatpush1.bf16.msra.mxu0 %v698
    %786 = vmatprep.subr.bf16.mxu0 0
    %787 = vmatpush1.bf16.msra.mxu0 %v695
    %788 = vmatprep.subr.bf16.mxu0 0
    %789 = vmatpush1.bf16.msra.mxu0 %v692
    %790 = vmatprep.subr.bf16.mxu0 0
    %791 = vmatpush1.bf16.msra.mxu0 %v689
    %792 = vmatprep.subr.bf16.mxu0 0
    %793 = vmatpush2.bf16.msra.mxu0 0
    %794 = vmatprep.subr.bf16.mxu0 0
    %795 = vmatpush2.bf16.msra.mxu0 0
    %796 = vmatprep.subr.bf16.mxu0 0
    %797 = vmatpush2.bf16.msra.mxu0 0
    %798 = vmatprep.subr.bf16.mxu0 0
    %799 = vmatpush2.bf16.msra.mxu0 0
    %800 = vmatprep.subr.bf16.mxu0 0
    %801 = vmatpush2.bf16.msra.mxu0 0
    %802 = vmatprep.subr.bf16.mxu0 0
    %803 = vmatpush2.bf16.msra.mxu0 0
    %804 = vmatprep.subr.bf16.mxu0 0
    %805 = vmatpush2.bf16.msra.mxu0 0
    %806 = vmatprep.subr.bf16.mxu0 0
    %807 = vmatpush2.bf16.msra.mxu0 0
    %808 = vmatprep.mubr.bf16.mxu0 0
    %809 = vmatmul.mubr.bf16.gmra.mxu0 %v574
    %v810 = vpop.f32.mrf.mxu0
    %v811 = vadd.f32 0.0, %v810
    %v812 = vpop.f32.mrf.mxu0
    %v813 = vpop.f32.mrf.mxu0
    %v814 = vpop.f32.mrf.mxu0
    %815 = vdwg.mxu0
    %v816 = vadd.f32 %v571, %v770
    %v817 = vxor.u32 %v816, 2147483648
    %v818 = vmul.f32 %v817, 1.442695
    %v819 = vpow.pop %v818
    %v820 = vadd.f32 %v819, 1.0
    %v821 = vrcp.pop %v820
    %v822 = vmul.f32 1.0, %v821
    %v823 = vadd.f32 %v572, %v772
    %v824 = vxor.u32 %v823, 2147483648
    %v825 = vmul.f32 %v824, 1.442695
    %v826 = vpow.pop %v825
    %v827 = vadd.f32 %v826, 1.0
    %v828 = vrcp.pop %v827
    %v829 = vmul.f32 1.0, %v828
    %v830 = vadd.f32 %v811, %v302
    %v831 = vmul.f32 %v822, %v830
    %v832 = vadd.f32 %v573, %v831
    %v833 = vtanh.pop %v832
    %v834 = vsub.f32 %v568, %v833
    %v835 = vmul.f32 %v829, %v834
    %v836 = vadd.f32 %v833, %v835
    %s837 = scalar_lea.vmem [#allocation6], 8
    %838 = vst [vmem:[%s837] sm:$0xff] %v836
    %s839 = smul.u32 4, 16
    %s840 = smul.u32 %s839, 3
    %s841 = sshll.u32 %s840, 4
    %842 = dma.done [#allocation4], %s841
    %s843 = sshll.u32 %s840, 4
    %844 = dma.done %s141, %s843
    %v845 = vld [vmem:[#allocation6] sm:$0xff]
    %v846 = vld [vmem:[#allocation6 + $0x8] sm:$0xff]
    %v847 = vpack.c.bf16 %v846, %v845
    %v848 = vld [vmem:[#allocation2] sm:$0xff]
    %v849 = vld [vmem:[#allocation2 + $0x8] sm:$0xf]
    %v850 = vld [vmem:[#allocation2 + $0xc] sm:$0xff]
    %v851 = vld [vmem:[#allocation2 + $0x14] sm:$0xf]
    %v852 = vld [vmem:[#allocation2 + $0x18] sm:$0xff]
    %v853 = vld [vmem:[#allocation2 + $0x20] sm:$0xf]
    %v854 = vld [vmem:[#allocation2 + $0x24] sm:$0xff]
    %v855 = vld [vmem:[#allocation2 + $0x2c] sm:$0xf]
    %v856 = vld [vmem:[#allocation2 + $0x30] sm:$0xff]
    %v857 = vld [vmem:[#allocation2 + $0x38] sm:$0xf]
    %v858 = vld [vmem:[#allocation2 + $0x3c] sm:$0xff]
    %v859 = vld [vmem:[#allocation2 + $0x44] sm:$0xf]
    %v860 = vld [vmem:[#allocation2 + $0x48] sm:$0xff]
    %v861 = vld [vmem:[#allocation2 + $0x50] sm:$0xf]
    %v862 = vld [vmem:[#allocation2 + $0x54] sm:$0xff]
    %v863 = vld [vmem:[#allocation2 + $0x5c] sm:$0xf]
    %v864 = vld [vmem:[#allocation2 + $0x60] sm:$0xff]
    %v865 = vld [vmem:[#allocation2 + $0x68] sm:$0xf]
    %v866 = vld [vmem:[#allocation2 + $0x6c] sm:$0xff]
    %v867 = vld [vmem:[#allocation2 + $0x74] sm:$0xf]
    %v868 = vld [vmem:[#allocation2 + $0x78] sm:$0xff]
    %v869 = vld [vmem:[#allocation2 + $0x80] sm:$0xf]
    %v870 = vld [vmem:[#allocation2 + $0x84] sm:$0xff]
    %v871 = vld [vmem:[#allocation2 + $0x8c] sm:$0xf]
    %v872 = vld [vmem:[#allocation2 + $0x90] sm:$0xff]
    %v873 = vld [vmem:[#allocation2 + $0x98] sm:$0xf]
    %v874 = vld [vmem:[#allocation2 + $0x9c] sm:$0xff]
    %v875 = vld [vmem:[#allocation2 + $0xa4] sm:$0xf]
    %v876 = vld [vmem:[#allocation2 + $0xa8] sm:$0xff]
    %v877 = vld [vmem:[#allocation2 + $0xb0] sm:$0xf]
    %v878 = vld [vmem:[#allocation2 + $0xb4] sm:$0xff]
    %v879 = vld [vmem:[#allocation2 + $0xbc] sm:$0xf]
    %v880 = vld [vmem:[#allocation22] sm:$0x7]
    %v882 = vlaneseq
    %v883 = vshrl.u32 %v882, 7
    %v884 = vsub.s32 0, %v883
    %v885 = vrot.slane %v880, %v884
    %v886 = vlaneseq
    %v887 = vshrl.u32 %v886, 7
    %v888 = vsub.s32 1, %v887
    %v889 = vrot.slane %v880, %v888
    %v890 = vlaneseq
    %v891 = vshrl.u32 %v890, 7
    %v892 = vsub.s32 2, %v891
    %v893 = vrot.slane %v880, %v892
    %v929 = vunpack.c.l.b16 %v848
    %v930 = vunpack.c.h.b16 %v848
    %v931 = vunpack.c.l.b16 %v849
    %v932 = vunpack.c.l.b16 %v850
    %v933 = vunpack.c.h.b16 %v850
    %v934 = vunpack.c.l.b16 %v851
    %v935 = vunpack.c.l.b16 %v852
    %v936 = vunpack.c.h.b16 %v852
    %v937 = vunpack.c.l.b16 %v853
    %v938 = vunpack.c.l.b16 %v854
    %v939 = vunpack.c.h.b16 %v854
    %v940 = vunpack.c.l.b16 %v855
    %v941 = vunpack.c.l.b16 %v856
    %v942 = vunpack.c.h.b16 %v856
    %v943 = vunpack.c.l.b16 %v857
    %v944 = vunpack.c.l.b16 %v858
    %v945 = vunpack.c.h.b16 %v858
    %v946 = vunpack.c.l.b16 %v859
    %v947 = vunpack.c.l.b16 %v860
    %v948 = vunpack.c.h.b16 %v860
    %v949 = vunpack.c.l.b16 %v861
    %v950 = vunpack.c.l.b16 %v862
    %v951 = vunpack.c.h.b16 %v862
    %v952 = vunpack.c.l.b16 %v863
    %v953 = vunpack.c.l.b16 %v864
    %v954 = vunpack.c.h.b16 %v864
    %v955 = vunpack.c.l.b16 %v865
    %v956 = vunpack.c.l.b16 %v866
    %v957 = vunpack.c.h.b16 %v866
    %v958 = vunpack.c.l.b16 %v867
    %v959 = vunpack.c.l.b16 %v868
    %v960 = vunpack.c.h.b16 %v868
    %v961 = vunpack.c.l.b16 %v869
    %v962 = vunpack.c.l.b16 %v870
    %v963 = vunpack.c.h.b16 %v870
    %v964 = vunpack.c.l.b16 %v871
    %v965 = vunpack.c.l.b16 %v872
    %v966 = vunpack.c.h.b16 %v872
    %v967 = vunpack.c.l.b16 %v873
    %v968 = vunpack.c.l.b16 %v874
    %v969 = vunpack.c.h.b16 %v874
    %v970 = vunpack.c.l.b16 %v875
    %v971 = vunpack.c.l.b16 %v876
    %v972 = vunpack.c.h.b16 %v876
    %v973 = vunpack.c.l.b16 %v877
    %v974 = vunpack.c.l.b16 %v878
    %v975 = vunpack.c.h.b16 %v878
    %v976 = vunpack.c.l.b16 %v879
    %v977 = vpack.c.b16 %v932, %v929
    %v978 = vpack.c.b16 %v933, %v930
    %v979 = vpack.c.b16 %v934, %v931
    %v980 = vpack.c.b16 %v938, %v935
    %v981 = vpack.c.b16 %v939, %v936
    %v982 = vpack.c.b16 %v940, %v937
    %v983 = vpack.c.b16 %v944, %v941
    %v984 = vpack.c.b16 %v945, %v942
    %v985 = vpack.c.b16 %v946, %v943
    %v986 = vpack.c.b16 %v950, %v947
    %v987 = vpack.c.b16 %v951, %v948
    %v988 = vpack.c.b16 %v952, %v949
    %v989 = vpack.c.b16 %v956, %v953
    %v990 = vpack.c.b16 %v957, %v954
    %v991 = vpack.c.b16 %v958, %v955
    %v992 = vpack.c.b16 %v962, %v959
    %v993 = vpack.c.b16 %v963, %v960
    %v994 = vpack.c.b16 %v964, %v961
    %v995 = vpack.c.b16 %v968, %v965
    %v996 = vpack.c.b16 %v969, %v966
    %v997 = vpack.c.b16 %v970, %v967
    %v998 = vpack.c.b16 %v974, %v971
    %v999 = vpack.c.b16 %v975, %v972
    %v1000 = vpack.c.b16 %v976, %v973
    %1025 = vmatprep.subr.bf16.mxu0 %v999
    %1026 = vmatpush1.bf16.msra.mxu0 %v998
    %1027 = vmatprep.subr.bf16.mxu0 %v996
    %1028 = vmatpush1.bf16.msra.mxu0 %v995
    %1029 = vmatprep.subr.bf16.mxu0 %v993
    %1030 = vmatpush1.bf16.msra.mxu0 %v992
    %1031 = vmatprep.subr.bf16.mxu0 %v990
    %1032 = vmatpush1.bf16.msra.mxu0 %v989
    %1033 = vmatprep.subr.bf16.mxu0 %v987
    %1034 = vmatpush1.bf16.msra.mxu0 %v986
    %1035 = vmatprep.subr.bf16.mxu0 %v984
    %1036 = vmatpush1.bf16.msra.mxu0 %v983
    %1037 = vmatprep.subr.bf16.mxu0 %v981
    %1038 = vmatpush1.bf16.msra.mxu0 %v980
    %1039 = vmatprep.subr.bf16.mxu0 %v978
    %1040 = vmatpush1.bf16.msra.mxu0 %v977
    %1041 = vmatprep.subr.bf16.mxu0 0
    %1042 = vmatpush2.bf16.msra.mxu0 0
    %1043 = vmatprep.subr.bf16.mxu0 0
    %1044 = vmatpush2.bf16.msra.mxu0 0
    %1045 = vmatprep.subr.bf16.mxu0 0
    %1046 = vmatpush2.bf16.msra.mxu0 0
    %1047 = vmatprep.subr.bf16.mxu0 0
    %1048 = vmatpush2.bf16.msra.mxu0 0
    %1049 = vmatprep.subr.bf16.mxu0 0
    %1050 = vmatpush2.bf16.msra.mxu0 0
    %1051 = vmatprep.subr.bf16.mxu0 0
    %1052 = vmatpush2.bf16.msra.mxu0 0
    %1053 = vmatprep.subr.bf16.mxu0 0
    %1054 = vmatpush2.bf16.msra.mxu0 0
    %1055 = vmatprep.subr.bf16.mxu0 0
    %1056 = vmatpush2.bf16.msra.mxu0 0
    %1057 = vmatprep.mubr.bf16.mxu0 0
    %1058 = vmatmul.mubr.bf16.gmra.mxu0 %v847
    %v1059 = vpop.f32.mrf.mxu0
    %v1060 = vadd.f32 %v885, %v1059
    %v1061 = vpop.f32.mrf.mxu0
    %v1062 = vadd.f32 %v889, %v1061
    %v1063 = vpop.f32.mrf.mxu0
    %v1064 = vadd.f32 %v885, %v1063
    %v1065 = vpop.f32.mrf.mxu0
    %v1066 = vadd.f32 %v889, %v1065
    %1067 = vdwg.mxu0
    %1068 = vmatprep.subr.bf16.mxu0 0
    %1069 = vmatpush1.bf16.msra.mxu0 %v1000
    %1070 = vmatprep.subr.bf16.mxu0 0
    %1071 = vmatpush1.bf16.msra.mxu0 %v997
    %1072 = vmatprep.subr.bf16.mxu0 0
    %1073 = vmatpush1.bf16.msra.mxu0 %v994
    %1074 = vmatprep.subr.bf16.mxu0 0
    %1075 = vmatpush1.bf16.msra.mxu0 %v991
    %1076 = vmatprep.subr.bf16.mxu0 0
    %1077 = vmatpush1.bf16.msra.mxu0 %v988
    %1078 = vmatprep.subr.bf16.mxu0 0
    %1079 = vmatpush1.bf16.msra.mxu0 %v985
    %1080 = vmatprep.subr.bf16.mxu0 0
    %1081 = vmatpush1.bf16.msra.mxu0 %v982
    %1082 = vmatprep.subr.bf16.mxu0 0
    %1083 = vmatpush1.bf16.msra.mxu0 %v979
    %1084 = vmatprep.subr.bf16.mxu0 0
    %1085 = vmatpush2.bf16.msra.mxu0 0
    %1086 = vmatprep.subr.bf16.mxu0 0
    %1087 = vmatpush2.bf16.msra.mxu0 0
    %1088 = vmatprep.subr.bf16.mxu0 0
    %1089 = vmatpush2.bf16.msra.mxu0 0
    %1090 = vmatprep.subr.bf16.mxu0 0
    %1091 = vmatpush2.bf16.msra.mxu0 0
    %1092 = vmatprep.subr.bf16.mxu0 0
    %1093 = vmatpush2.bf16.msra.mxu0 0
    %1094 = vmatprep.subr.bf16.mxu0 0
    %1095 = vmatpush2.bf16.msra.mxu0 0
    %1096 = vmatprep.subr.bf16.mxu0 0
    %1097 = vmatpush2.bf16.msra.mxu0 0
    %1098 = vmatprep.subr.bf16.mxu0 0
    %1099 = vmatpush2.bf16.msra.mxu0 0
    %1100 = vmatprep.mubr.bf16.mxu0 0
    %1101 = vmatmul.mubr.bf16.gmra.mxu0 %v847
    %v1102 = vpop.f32.mrf.mxu0
    %v1103 = vadd.f32 %v893, %v1102
    %v1104 = vpop.f32.mrf.mxu0
    %v1105 = vpop.f32.mrf.mxu0
    %v1106 = vadd.f32 %v893, %v1105
    %v1107 = vpop.f32.mrf.mxu0
    %1108 = vdwg.mxu0
    %1109 = vst [vmem:[#allocation7] sm:$0xff] %v1060
    %1110 = vst [vmem:[#allocation7 + $0x8] sm:$0xff] %v1062
    %1111 = vst [vmem:[#allocation7 + $0x10] sm:$0xff] %v1103
    %1112 = vst [vmem:[#allocation7 + $0x18] sm:$0xff] %v1064
    %1113 = vst [vmem:[#allocation7 + $0x20] sm:$0xff] %v1066
    %1114 = vst [vmem:[#allocation7 + $0x28] sm:$0xff] %v1106
    %v1115 = vld [vmem:[%s8] sm:$0x1]
    %v1117 = vlaneseq
    %v1118 = vshrl.u32 %v1117, 7
    %v1119 = vsub.s32 0, %v1118
    %v1120 = vrot.slane %v1115, %v1119
    %v1122 = vld [vmem:[#allocation7] sm:$0xff]
    %v1123 = vld [vmem:[#allocation7 + $0x8] sm:$0xff]
    %v1124 = vld [vmem:[#allocation7 + $0x10] sm:$0xff]
    %v1125 = vld [vmem:[#allocation3] sm:$0xff]
    %v1126 = vld [vmem:[#allocation3 + $0x8] sm:$0xf]
    %v1127 = vld [vmem:[#allocation3 + $0xc] sm:$0xff]
    %v1128 = vld [vmem:[#allocation3 + $0x14] sm:$0xf]
    %v1129 = vld [vmem:[#allocation3 + $0x18] sm:$0xff]
    %v1130 = vld [vmem:[#allocation3 + $0x20] sm:$0xf]
    %v1131 = vld [vmem:[#allocation3 + $0x24] sm:$0xff]
    %v1132 = vld [vmem:[#allocation3 + $0x2c] sm:$0xf]
    %v1133 = vld [vmem:[#allocation3 + $0x30] sm:$0xff]
    %v1134 = vld [vmem:[#allocation3 + $0x38] sm:$0xf]
    %v1135 = vld [vmem:[#allocation3 + $0x3c] sm:$0xff]
    %v1136 = vld [vmem:[#allocation3 + $0x44] sm:$0xf]
    %v1137 = vld [vmem:[#allocation3 + $0x48] sm:$0xff]
    %v1138 = vld [vmem:[#allocation3 + $0x50] sm:$0xf]
    %v1139 = vld [vmem:[#allocation3 + $0x54] sm:$0xff]
    %v1140 = vld [vmem:[#allocation3 + $0x5c] sm:$0xf]
    %v1141 = vld [vmem:[#allocation3 + $0x60] sm:$0xff]
    %v1142 = vld [vmem:[#allocation3 + $0x68] sm:$0xf]
    %v1143 = vld [vmem:[#allocation3 + $0x6c] sm:$0xff]
    %v1144 = vld [vmem:[#allocation3 + $0x74] sm:$0xf]
    %v1145 = vld [vmem:[#allocation3 + $0x78] sm:$0xff]
    %v1146 = vld [vmem:[#allocation3 + $0x80] sm:$0xf]
    %v1147 = vld [vmem:[#allocation3 + $0x84] sm:$0xff]
    %v1148 = vld [vmem:[#allocation3 + $0x8c] sm:$0xf]
    %v1149 = vld [vmem:[#allocation3 + $0x90] sm:$0xff]
    %v1150 = vld [vmem:[#allocation3 + $0x98] sm:$0xf]
    %v1151 = vld [vmem:[#allocation3 + $0x9c] sm:$0xff]
    %v1152 = vld [vmem:[#allocation3 + $0xa4] sm:$0xf]
    %v1153 = vld [vmem:[#allocation3 + $0xa8] sm:$0xff]
    %v1154 = vld [vmem:[#allocation3 + $0xb0] sm:$0xf]
    %v1155 = vld [vmem:[#allocation3 + $0xb4] sm:$0xff]
    %v1156 = vld [vmem:[#allocation3 + $0xbc] sm:$0xf]
    %v1189 = vunpack.c.l.b16 %v1125
    %v1190 = vunpack.c.h.b16 %v1125
    %v1191 = vunpack.c.l.b16 %v1126
    %v1192 = vunpack.c.l.b16 %v1127
    %v1193 = vunpack.c.h.b16 %v1127
    %v1194 = vunpack.c.l.b16 %v1128
    %v1195 = vunpack.c.l.b16 %v1129
    %v1196 = vunpack.c.h.b16 %v1129
    %v1197 = vunpack.c.l.b16 %v1130
    %v1198 = vunpack.c.l.b16 %v1131
    %v1199 = vunpack.c.h.b16 %v1131
    %v1200 = vunpack.c.l.b16 %v1132
    %v1201 = vunpack.c.l.b16 %v1133
    %v1202 = vunpack.c.h.b16 %v1133
    %v1203 = vunpack.c.l.b16 %v1134
    %v1204 = vunpack.c.l.b16 %v1135
    %v1205 = vunpack.c.h.b16 %v1135
    %v1206 = vunpack.c.l.b16 %v1136
    %v1207 = vunpack.c.l.b16 %v1137
    %v1208 = vunpack.c.h.b16 %v1137
    %v1209 = vunpack.c.l.b16 %v1138
    %v1210 = vunpack.c.l.b16 %v1139
    %v1211 = vunpack.c.h.b16 %v1139
    %v1212 = vunpack.c.l.b16 %v1140
    %v1213 = vunpack.c.l.b16 %v1141
    %v1214 = vunpack.c.h.b16 %v1141
    %v1215 = vunpack.c.l.b16 %v1142
    %v1216 = vunpack.c.l.b16 %v1143
    %v1217 = vunpack.c.h.b16 %v1143
    %v1218 = vunpack.c.l.b16 %v1144
    %v1219 = vunpack.c.l.b16 %v1145
    %v1220 = vunpack.c.h.b16 %v1145
    %v1221 = vunpack.c.l.b16 %v1146
    %v1222 = vunpack.c.l.b16 %v1147
    %v1223 = vunpack.c.h.b16 %v1147
    %v1224 = vunpack.c.l.b16 %v1148
    %v1225 = vunpack.c.l.b16 %v1149
    %v1226 = vunpack.c.h.b16 %v1149
    %v1227 = vunpack.c.l.b16 %v1150
    %v1228 = vunpack.c.l.b16 %v1151
    %v1229 = vunpack.c.h.b16 %v1151
    %v1230 = vunpack.c.l.b16 %v1152
    %v1231 = vunpack.c.l.b16 %v1153
    %v1232 = vunpack.c.h.b16 %v1153
    %v1233 = vunpack.c.l.b16 %v1154
    %v1234 = vunpack.c.l.b16 %v1155
    %v1235 = vunpack.c.h.b16 %v1155
    %v1236 = vunpack.c.l.b16 %v1156
    %v1237 = vpack.c.b16 %v1192, %v1189
    %v1238 = vpack.c.b16 %v1193, %v1190
    %v1239 = vpack.c.b16 %v1194, %v1191
    %v1240 = vpack.c.b16 %v1198, %v1195
    %v1241 = vpack.c.b16 %v1199, %v1196
    %v1242 = vpack.c.b16 %v1200, %v1197
    %v1243 = vpack.c.b16 %v1204, %v1201
    %v1244 = vpack.c.b16 %v1205, %v1202
    %v1245 = vpack.c.b16 %v1206, %v1203
    %v1246 = vpack.c.b16 %v1210, %v1207
    %v1247 = vpack.c.b16 %v1211, %v1208
    %v1248 = vpack.c.b16 %v1212, %v1209
    %v1249 = vpack.c.b16 %v1216, %v1213
    %v1250 = vpack.c.b16 %v1217, %v1214
    %v1251 = vpack.c.b16 %v1218, %v1215
    %v1252 = vpack.c.b16 %v1222, %v1219
    %v1253 = vpack.c.b16 %v1223, %v1220
    %v1254 = vpack.c.b16 %v1224, %v1221
    %v1255 = vpack.c.b16 %v1228, %v1225
    %v1256 = vpack.c.b16 %v1229, %v1226
    %v1257 = vpack.c.b16 %v1230, %v1227
    %v1258 = vpack.c.b16 %v1234, %v1231
    %v1259 = vpack.c.b16 %v1235, %v1232
    %v1260 = vpack.c.b16 %v1236, %v1233
    %1285 = vmatprep.subr.bf16.mxu0 %v1259
    %1286 = vmatpush1.bf16.msra.mxu0 %v1258
    %1287 = vmatprep.subr.bf16.mxu0 %v1256
    %1288 = vmatpush1.bf16.msra.mxu0 %v1255
    %1289 = vmatprep.subr.bf16.mxu0 %v1253
    %1290 = vmatpush1.bf16.msra.mxu0 %v1252
    %1291 = vmatprep.subr.bf16.mxu0 %v1250
    %1292 = vmatpush1.bf16.msra.mxu0 %v1249
    %1293 = vmatprep.subr.bf16.mxu0 %v1247
    %1294 = vmatpush1.bf16.msra.mxu0 %v1246
    %1295 = vmatprep.subr.bf16.mxu0 %v1244
    %1296 = vmatpush1.bf16.msra.mxu0 %v1243
    %1297 = vmatprep.subr.bf16.mxu0 %v1241
    %1298 = vmatpush1.bf16.msra.mxu0 %v1240
    %1299 = vmatprep.subr.bf16.mxu0 %v1238
    %1300 = vmatpush1.bf16.msra.mxu0 %v1237
    %1301 = vmatprep.subr.bf16.mxu0 0
    %1302 = vmatpush2.bf16.msra.mxu0 0
    %1303 = vmatprep.subr.bf16.mxu0 0
    %1304 = vmatpush2.bf16.msra.mxu0 0
    %1305 = vmatprep.subr.bf16.mxu0 0
    %1306 = vmatpush2.bf16.msra.mxu0 0
    %1307 = vmatprep.subr.bf16.mxu0 0
    %1308 = vmatpush2.bf16.msra.mxu0 0
    %1309 = vmatprep.subr.bf16.mxu0 0
    %1310 = vmatpush2.bf16.msra.mxu0 0
    %1311 = vmatprep.subr.bf16.mxu0 0
    %1312 = vmatpush2.bf16.msra.mxu0 0
    %1313 = vmatprep.subr.bf16.mxu0 0
    %1314 = vmatpush2.bf16.msra.mxu0 0
    %1315 = vmatprep.subr.bf16.mxu0 0
    %1316 = vmatpush2.bf16.msra.mxu0 0
    %1317 = vmatprep.mubr.bf16.mxu0 0
    %1318 = vmatmul.mubr.bf16.gmra.mxu0 0
    %v1319 = vpop.f32.mrf.mxu0
    %v1320 = vadd.f32 0.0, %v1319
    %v1321 = vpop.f32.mrf.mxu0
    %v1322 = vadd.f32 0.0, %v1321
    %v1323 = vpop.f32.mrf.mxu0
    %v1324 = vpop.f32.mrf.mxu0
    %1325 = vdwg.mxu0
    %1326 = vmatprep.subr.bf16.mxu0 0
    %1327 = vmatpush1.bf16.msra.mxu0 %v1260
    %1328 = vmatprep.subr.bf16.mxu0 0
    %1329 = vmatpush1.bf16.msra.mxu0 %v1257
    %1330 = vmatprep.subr.bf16.mxu0 0
    %1331 = vmatpush1.bf16.msra.mxu0 %v1254
    %1332 = vmatprep.subr.bf16.mxu0 0
    %1333 = vmatpush1.bf16.msra.mxu0 %v1251
    %1334 = vmatprep.subr.bf16.mxu0 0
    %1335 = vmatpush1.bf16.msra.mxu0 %v1248
    %1336 = vmatprep.subr.bf16.mxu0 0
    %1337 = vmatpush1.bf16.msra.mxu0 %v1245
    %1338 = vmatprep.subr.bf16.mxu0 0
    %1339 = vmatpush1.bf16.msra.mxu0 %v1242
    %1340 = vmatprep.subr.bf16.mxu0 0
    %1341 = vmatpush1.bf16.msra.mxu0 %v1239
    %1342 = vmatprep.subr.bf16.mxu0 0
    %1343 = vmatpush2.bf16.msra.mxu0 0
    %1344 = vmatprep.subr.bf16.mxu0 0
    %1345 = vmatpush2.bf16.msra.mxu0 0
    %1346 = vmatprep.subr.bf16.mxu0 0
    %1347 = vmatpush2.bf16.msra.mxu0 0
    %1348 = vmatprep.subr.bf16.mxu0 0
    %1349 = vmatpush2.bf16.msra.mxu0 0
    %1350 = vmatprep.subr.bf16.mxu0 0
    %1351 = vmatpush2.bf16.msra.mxu0 0
    %1352 = vmatprep.subr.bf16.mxu0 0
    %1353 = vmatpush2.bf16.msra.mxu0 0
    %1354 = vmatprep.subr.bf16.mxu0 0
    %1355 = vmatpush2.bf16.msra.mxu0 0
    %1356 = vmatprep.subr.bf16.mxu0 0
    %1357 = vmatpush2.bf16.msra.mxu0 0
    %1358 = vmatprep.mubr.bf16.mxu0 0
    %1359 = vmatmul.mubr.bf16.gmra.mxu0 0
    %v1360 = vpop.f32.mrf.mxu0
    %v1361 = vadd.f32 0.0, %v1360
    %v1362 = vpop.f32.mrf.mxu0
    %v1363 = vpop.f32.mrf.mxu0
    %v1364 = vpop.f32.mrf.mxu0
    %1365 = vdwg.mxu0
    %v1366 = vadd.f32 %v1122, %v1320
    %v1367 = vxor.u32 %v1366, 2147483648
    %v1368 = vmul.f32 %v1367, 1.442695
    %v1369 = vpow.pop %v1368
    %v1370 = vadd.f32 %v1369, 1.0
    %v1371 = vrcp.pop %v1370
    %v1372 = vmul.f32 1.0, %v1371
    %v1373 = vadd.f32 %v1123, %v1322
    %v1374 = vxor.u32 %v1373, 2147483648
    %v1375 = vmul.f32 %v1374, 1.442695
    %v1376 = vpow.pop %v1375
    %v1377 = vadd.f32 %v1376, 1.0
    %v1378 = vrcp.pop %v1377
    %v1379 = vmul.f32 1.0, %v1378
    %v1380 = vadd.f32 %v1361, %v1120
    %v1381 = vmul.f32 %v1372, %v1380
    %v1382 = vadd.f32 %v1124, %v1381
    %v1383 = vtanh.pop %v1382
    %v1384 = vsub.f32 0.0, %v1383
    %v1385 = vmul.f32 %v1379, %v1384
    %v1386 = vadd.f32 %v1383, %v1385
    %1387 = vst [vmem:[#allocation8] sm:$0xff] %v1386
    %s1388 = scalar_lea.vmem [#allocation7], 24
    %v1389 = vld [vmem:[%s1388] sm:$0xff]
    %v1390 = vld [vmem:[%s1388 + $0x8] sm:$0xff]
    %v1391 = vld [vmem:[%s1388 + $0x10] sm:$0xff]
    %v1392 = vpack.c.bf16 %v1386, %v1386
    %v1393 = vld [vmem:[#allocation3] sm:$0xff]
    %v1394 = vld [vmem:[#allocation3 + $0x8] sm:$0xf]
    %v1395 = vld [vmem:[#allocation3 + $0xc] sm:$0xff]
    %v1396 = vld [vmem:[#allocation3 + $0x14] sm:$0xf]
    %v1397 = vld [vmem:[#allocation3 + $0x18] sm:$0xff]
    %v1398 = vld [vmem:[#allocation3 + $0x20] sm:$0xf]
    %v1399 = vld [vmem:[#allocation3 + $0x24] sm:$0xff]
    %v1400 = vld [vmem:[#allocation3 + $0x2c] sm:$0xf]
    %v1401 = vld [vmem:[#allocation3 + $0x30] sm:$0xff]
    %v1402 = vld [vmem:[#allocation3 + $0x38] sm:$0xf]
    %v1403 = vld [vmem:[#allocation3 + $0x3c] sm:$0xff]
    %v1404 = vld [vmem:[#allocation3 + $0x44] sm:$0xf]
    %v1405 = vld [vmem:[#allocation3 + $0x48] sm:$0xff]
    %v1406 = vld [vmem:[#allocation3 + $0x50] sm:$0xf]
    %v1407 = vld [vmem:[#allocation3 + $0x54] sm:$0xff]
    %v1408 = vld [vmem:[#allocation3 + $0x5c] sm:$0xf]
    %v1409 = vld [vmem:[#allocation3 + $0x60] sm:$0xff]
    %v1410 = vld [vmem:[#allocation3 + $0x68] sm:$0xf]
    %v1411 = vld [vmem:[#allocation3 + $0x6c] sm:$0xff]
    %v1412 = vld [vmem:[#allocation3 + $0x74] sm:$0xf]
    %v1413 = vld [vmem:[#allocation3 + $0x78] sm:$0xff]
    %v1414 = vld [vmem:[#allocation3 + $0x80] sm:$0xf]
    %v1415 = vld [vmem:[#allocation3 + $0x84] sm:$0xff]
    %v1416 = vld [vmem:[#allocation3 + $0x8c] sm:$0xf]
    %v1417 = vld [vmem:[#allocation3 + $0x90] sm:$0xff]
    %v1418 = vld [vmem:[#allocation3 + $0x98] sm:$0xf]
    %v1419 = vld [vmem:[#allocation3 + $0x9c] sm:$0xff]
    %v1420 = vld [vmem:[#allocation3 + $0xa4] sm:$0xf]
    %v1421 = vld [vmem:[#allocation3 + $0xa8] sm:$0xff]
    %v1422 = vld [vmem:[#allocation3 + $0xb0] sm:$0xf]
    %v1423 = vld [vmem:[#allocation3 + $0xb4] sm:$0xff]
    %v1424 = vld [vmem:[#allocation3 + $0xbc] sm:$0xf]
    %v1457 = vunpack.c.l.b16 %v1393
    %v1458 = vunpack.c.h.b16 %v1393
    %v1459 = vunpack.c.l.b16 %v1394
    %v1460 = vunpack.c.l.b16 %v1395
    %v1461 = vunpack.c.h.b16 %v1395
    %v1462 = vunpack.c.l.b16 %v1396
    %v1463 = vunpack.c.l.b16 %v1397
    %v1464 = vunpack.c.h.b16 %v1397
    %v1465 = vunpack.c.l.b16 %v1398
    %v1466 = vunpack.c.l.b16 %v1399
    %v1467 = vunpack.c.h.b16 %v1399
    %v1468 = vunpack.c.l.b16 %v1400
    %v1469 = vunpack.c.l.b16 %v1401
    %v1470 = vunpack.c.h.b16 %v1401
    %v1471 = vunpack.c.l.b16 %v1402
    %v1472 = vunpack.c.l.b16 %v1403
    %v1473 = vunpack.c.h.b16 %v1403
    %v1474 = vunpack.c.l.b16 %v1404
    %v1475 = vunpack.c.l.b16 %v1405
    %v1476 = vunpack.c.h.b16 %v1405
    %v1477 = vunpack.c.l.b16 %v1406
    %v1478 = vunpack.c.l.b16 %v1407
    %v1479 = vunpack.c.h.b16 %v1407
    %v1480 = vunpack.c.l.b16 %v1408
    %v1481 = vunpack.c.l.b16 %v1409
    %v1482 = vunpack.c.h.b16 %v1409
    %v1483 = vunpack.c.l.b16 %v1410
    %v1484 = vunpack.c.l.b16 %v1411
    %v1485 = vunpack.c.h.b16 %v1411
    %v1486 = vunpack.c.l.b16 %v1412
    %v1487 = vunpack.c.l.b16 %v1413
    %v1488 = vunpack.c.h.b16 %v1413
    %v1489 = vunpack.c.l.b16 %v1414
    %v1490 = vunpack.c.l.b16 %v1415
    %v1491 = vunpack.c.h.b16 %v1415
    %v1492 = vunpack.c.l.b16 %v1416
    %v1493 = vunpack.c.l.b16 %v1417
    %v1494 = vunpack.c.h.b16 %v1417
    %v1495 = vunpack.c.l.b16 %v1418
    %v1496 = vunpack.c.l.b16 %v1419
    %v1497 = vunpack.c.h.b16 %v1419
    %v1498 = vunpack.c.l.b16 %v1420
    %v1499 = vunpack.c.l.b16 %v1421
    %v1500 = vunpack.c.h.b16 %v1421
    %v1501 = vunpack.c.l.b16 %v1422
    %v1502 = vunpack.c.l.b16 %v1423
    %v1503 = vunpack.c.h.b16 %v1423
    %v1504 = vunpack.c.l.b16 %v1424
    %v1505 = vpack.c.b16 %v1460, %v1457
    %v1506 = vpack.c.b16 %v1461, %v1458
    %v1507 = vpack.c.b16 %v1462, %v1459
    %v1508 = vpack.c.b16 %v1466, %v1463
    %v1509 = vpack.c.b16 %v1467, %v1464
    %v1510 = vpack.c.b16 %v1468, %v1465
    %v1511 = vpack.c.b16 %v1472, %v1469
    %v1512 = vpack.c.b16 %v1473, %v1470
    %v1513 = vpack.c.b16 %v1474, %v1471
    %v1514 = vpack.c.b16 %v1478, %v1475
    %v1515 = vpack.c.b16 %v1479, %v1476
    %v1516 = vpack.c.b16 %v1480, %v1477
    %v1517 = vpack.c.b16 %v1484, %v1481
    %v1518 = vpack.c.b16 %v1485, %v1482
    %v1519 = vpack.c.b16 %v1486, %v1483
    %v1520 = vpack.c.b16 %v1490, %v1487
    %v1521 = vpack.c.b16 %v1491, %v1488
    %v1522 = vpack.c.b16 %v1492, %v1489
    %v1523 = vpack.c.b16 %v1496, %v1493
    %v1524 = vpack.c.b16 %v1497, %v1494
    %v1525 = vpack.c.b16 %v1498, %v1495
    %v1526 = vpack.c.b16 %v1502, %v1499
    %v1527 = vpack.c.b16 %v1503, %v1500
    %v1528 = vpack.c.b16 %v1504, %v1501
    %1553 = vmatprep.subr.bf16.mxu0 %v1527
    %1554 = vmatpush1.bf16.msra.mxu0 %v1526
    %1555 = vmatprep.subr.bf16.mxu0 %v1524
    %1556 = vmatpush1.bf16.msra.mxu0 %v1523
    %1557 = vmatprep.subr.bf16.mxu0 %v1521
    %1558 = vmatpush1.bf16.msra.mxu0 %v1520
    %1559 = vmatprep.subr.bf16.mxu0 %v1518
    %1560 = vmatpush1.bf16.msra.mxu0 %v1517
    %1561 = vmatprep.subr.bf16.mxu0 %v1515
    %1562 = vmatpush1.bf16.msra.mxu0 %v1514
    %1563 = vmatprep.subr.bf16.mxu0 %v1512
    %1564 = vmatpush1.bf16.msra.mxu0 %v1511
    %1565 = vmatprep.subr.bf16.mxu0 %v1509
    %1566 = vmatpush1.bf16.msra.mxu0 %v1508
    %1567 = vmatprep.subr.bf16.mxu0 %v1506
    %1568 = vmatpush1.bf16.msra.mxu0 %v1505
    %1569 = vmatprep.subr.bf16.mxu0 0
    %1570 = vmatpush2.bf16.msra.mxu0 0
    %1571 = vmatprep.subr.bf16.mxu0 0
    %1572 = vmatpush2.bf16.msra.mxu0 0
    %1573 = vmatprep.subr.bf16.mxu0 0
    %1574 = vmatpush2.bf16.msra.mxu0 0
    %1575 = vmatprep.subr.bf16.mxu0 0
    %1576 = vmatpush2.bf16.msra.mxu0 0
    %1577 = vmatprep.subr.bf16.mxu0 0
    %1578 = vmatpush2.bf16.msra.mxu0 0
    %1579 = vmatprep.subr.bf16.mxu0 0
    %1580 = vmatpush2.bf16.msra.mxu0 0
    %1581 = vmatprep.subr.bf16.mxu0 0
    %1582 = vmatpush2.bf16.msra.mxu0 0
    %1583 = vmatprep.subr.bf16.mxu0 0
    %1584 = vmatpush2.bf16.msra.mxu0 0
    %1585 = vmatprep.mubr.bf16.mxu0 0
    %1586 = vmatmul.mubr.bf16.gmra.mxu0 %v1392
    %v1587 = vpop.f32.mrf.mxu0
    %v1588 = vadd.f32 0.0, %v1587
    %v1589 = vpop.f32.mrf.mxu0
    %v1590 = vadd.f32 0.0, %v1589
    %v1591 = vpop.f32.mrf.mxu0
    %v1592 = vpop.f32.mrf.mxu0
    %1593 = vdwg.mxu0
    %1594 = vmatprep.subr.bf16.mxu0 0
    %1595 = vmatpush1.bf16.msra.mxu0 %v1528
    %1596 = vmatprep.subr.bf16.mxu0 0
    %1597 = vmatpush1.bf16.msra.mxu0 %v1525
    %1598 = vmatprep.subr.bf16.mxu0 0
    %1599 = vmatpush1.bf16.msra.mxu0 %v1522
    %1600 = vmatprep.subr.bf16.mxu0 0
    %1601 = vmatpush1.bf16.msra.mxu0 %v1519
    %1602 = vmatprep.subr.bf16.mxu0 0
    %1603 = vmatpush1.bf16.msra.mxu0 %v1516
    %1604 = vmatprep.subr.bf16.mxu0 0
    %1605 = vmatpush1.bf16.msra.mxu0 %v1513
    %1606 = vmatprep.subr.bf16.mxu0 0
    %1607 = vmatpush1.bf16.msra.mxu0 %v1510
    %1608 = vmatprep.subr.bf16.mxu0 0
    %1609 = vmatpush1.bf16.msra.mxu0 %v1507
    %1610 = vmatprep.subr.bf16.mxu0 0
    %1611 = vmatpush2.bf16.msra.mxu0 0
    %1612 = vmatprep.subr.bf16.mxu0 0
    %1613 = vmatpush2.bf16.msra.mxu0 0
    %1614 = vmatprep.subr.bf16.mxu0 0
    %1615 = vmatpush2.bf16.msra.mxu0 0
    %1616 = vmatprep.subr.bf16.mxu0 0
    %1617 = vmatpush2.bf16.msra.mxu0 0
    %1618 = vmatprep.subr.bf16.mxu0 0
    %1619 = vmatpush2.bf16.msra.mxu0 0
    %1620 = vmatprep.subr.bf16.mxu0 0
    %1621 = vmatpush2.bf16.msra.mxu0 0
    %1622 = vmatprep.subr.bf16.mxu0 0
    %1623 = vmatpush2.bf16.msra.mxu0 0
    %1624 = vmatprep.subr.bf16.mxu0 0
    %1625 = vmatpush2.bf16.msra.mxu0 0
    %1626 = vmatprep.mubr.bf16.mxu0 0
    %1627 = vmatmul.mubr.bf16.gmra.mxu0 %v1392
    %v1628 = vpop.f32.mrf.mxu0
    %v1629 = vadd.f32 0.0, %v1628
    %v1630 = vpop.f32.mrf.mxu0
    %v1631 = vpop.f32.mrf.mxu0
    %v1632 = vpop.f32.mrf.mxu0
    %1633 = vdwg.mxu0
    %v1634 = vadd.f32 %v1389, %v1588
    %v1635 = vxor.u32 %v1634, 2147483648
    %v1636 = vmul.f32 %v1635, 1.442695
    %v1637 = vpow.pop %v1636
    %v1638 = vadd.f32 %v1637, 1.0
    %v1639 = vrcp.pop %v1638
    %v1640 = vmul.f32 1.0, %v1639
    %v1641 = vadd.f32 %v1390, %v1590
    %v1642 = vxor.u32 %v1641, 2147483648
    %v1643 = vmul.f32 %v1642, 1.442695
    %v1644 = vpow.pop %v1643
    %v1645 = vadd.f32 %v1644, 1.0
    %v1646 = vrcp.pop %v1645
    %v1647 = vmul.f32 1.0, %v1646
    %v1648 = vadd.f32 %v1629, %v1120
    %v1649 = vmul.f32 %v1640, %v1648
    %v1650 = vadd.f32 %v1391, %v1649
    %v1651 = vtanh.pop %v1650
    %v1652 = vsub.f32 %v1386, %v1651
    %v1653 = vmul.f32 %v1647, %v1652
    %v1654 = vadd.f32 %v1651, %v1653
    %s1655 = scalar_lea.vmem [#allocation8], 8
    %1656 = vst [vmem:[%s1655] sm:$0xff] %v1654
    %v1657 = vld [vmem:[#allocation8] sm:$0xff]
    %v1658 = vld [vmem:[#allocation8 + $0x8] sm:$0xff]
    %v1659 = vld [vmem:[%s9] sm:$0x7]
    %s1660 = sld [smem:[#allocation24]]
    %s1661 = sld [smem:[#allocation24 + $0x1]]
    %s1662 = sld [smem:[#allocation24 + $0x2]]
    %s1663 = sld [smem:[#allocation24 + $0x80]]
    %s1664 = sld [smem:[#allocation24 + $0x81]]
    %s1665 = sld [smem:[#allocation24 + $0x82]]
    %s1666 = sld [smem:[#allocation24 + $0x100]]
    %s1667 = sld [smem:[#allocation24 + $0x101]]
    %s1668 = sld [smem:[#allocation24 + $0x102]]
    %v1669 = vlaneseq
    %v1670 = vshrl.u32 %v1669, 7
    %v1671 = vsub.s32 0, %v1670
    %v1672 = vrot.slane %v1659, %v1671
    %v1673 = vmul.f32 %v1657, %v1672
    %v1674 = vmul.f32 %v1658, %v1672
    %1675 = vadd.xlane.f32.xlu0 %v1673
    %v1676 = vpop.xlane.xlu0 %1675
    %1677 = vadd.xlane.f32.xlu0 %v1674
    %v1678 = vpop.xlane.xlu0 %1677
    %s1679 = sadd.f32 %s1663, %s1666
    %v1680 = vstv %s1679
    %v1681 = vadd.f32 %v1676, %v1680
    %v1682 = vadd.f32 %v1678, %v1680
    %v1685 = vlaneseq
    %v1686 = vand.u32 %v1685, 127
    %v1687 = vlaneseq
    %v1688 = vshrl.u32 %v1687, 7
    %v1689 = vsub.s32 %v1686, %v1688
    %v1690 = vrot.slane %v1681, %v1689
    %v1691 = vlaneseq
    %v1692 = vshrl.u32 %v1691, 7
    %v1693 = vsub.s32 %v1686, %v1692
    %v1694 = vrot.slane %v1682, %v1693
    %vm1695 = vcmask 1041409
    %v1696 = vsel %vm1695, %v1694, %v1690
    %vm1698 = vcmask 58368
    %1699 = vst.msk [vmem:[#allocation9] sm:$0x3] %vm1698, %v1696
    %v1700 = vlaneseq
    %v1701 = vshrl.u32 %v1700, 7
    %v1702 = vsub.s32 1, %v1701
    %v1703 = vrot.slane %v1659, %v1702
    %v1704 = vmul.f32 %v1657, %v1703
    %v1705 = vmul.f32 %v1658, %v1703
    %1706 = vadd.xlane.f32.xlu0 %v1704
    %v1707 = vpop.xlane.xlu0 %1706
    %1708 = vadd.xlane.f32.xlu0 %v1705
    %v1709 = vpop.xlane.xlu0 %1708
    %s1710 = sadd.f32 %s1664, %s1667
    %v1711 = vstv %s1710
    %v1712 = vadd.f32 %v1707, %v1711
    %v1713 = vadd.f32 %v1709, %v1711
    %v1716 = vlaneseq
    %v1717 = vshrl.u32 %v1716, 7
    %v1718 = vsub.s32 %v1686, %v1717
    %v1719 = vrot.slane %v1712, %v1718
    %v1720 = vlaneseq
    %v1721 = vshrl.u32 %v1720, 7
    %v1722 = vsub.s32 %v1686, %v1721
    %v1723 = vrot.slane %v1713, %v1722
    %v1724 = vsel %vm1695, %v1723, %v1719
    %1726 = vst.msk [vmem:[#allocation10] sm:$0x3] %vm1698, %v1724
    %v1727 = vlaneseq
    %v1728 = vshrl.u32 %v1727, 7
    %v1729 = vsub.s32 2, %v1728
    %v1730 = vrot.slane %v1659, %v1729
    %v1731 = vmul.f32 %v1657, %v1730
    %v1732 = vmul.f32 %v1658, %v1730
    %1733 = vadd.xlane.f32.xlu0 %v1731
    %v1734 = vpop.xlane.xlu0 %1733
    %1735 = vadd.xlane.f32.xlu0 %v1732
    %v1736 = vpop.xlane.xlu0 %1735
    %v1737 = vstv %s1665
    %v1738 = vadd.f32 %v1734, %v1737
    %v1739 = vadd.f32 %v1736, %v1737
    %v1742 = vlaneseq
    %v1743 = vshrl.u32 %v1742, 7
    %v1744 = vsub.s32 %v1686, %v1743
    %v1745 = vrot.slane %v1738, %v1744
    %v1746 = vlaneseq
    %v1747 = vshrl.u32 %v1746, 7
    %v1748 = vsub.s32 %v1686, %v1747
    %v1749 = vrot.slane %v1739, %v1748
    %v1750 = vsel %vm1695, %v1749, %v1745
    %1752 = vst.msk [vmem:[#allocation11] sm:$0x3] %vm1698, %v1750
    %v1753 = vld [vmem:[#allocation9] sm:$0x1]
    %v1754 = vstv %s1660
    %v1755 = vmul.f32 %v1754, 0.0
    %v1756 = vadd.f32 %v1753, %v1755
    %v1757 = vxor.u32 %v1756, 2147483648
    %v1758 = vmul.f32 %v1757, 1.442695
    %v1759 = vpow.pop %v1758
    %v1760 = vadd.f32 %v1759, 1.0
    %v1761 = vrcp.pop %v1760
    %v1762 = vmul.f32 1.0, %v1761
    %v1763 = vld [vmem:[#allocation10] sm:$0x1]
    %v1764 = vstv %s1661
    %v1765 = vmul.f32 %v1764, 0.0
    %v1766 = vadd.f32 %v1763, %v1765
    %v1767 = vxor.u32 %v1766, 2147483648
    %v1768 = vmul.f32 %v1767, 1.442695
    %v1769 = vpow.pop %v1768
    %v1770 = vadd.f32 %v1769, 1.0
    %v1771 = vrcp.pop %v1770
    %v1772 = vmul.f32 1.0, %v1771
    %v1773 = vld [vmem:[#allocation11] sm:$0x1]
    %v1774 = vstv %s1662
    %v1775 = vmul.f32 %v1774, 0.0
    %v1776 = vstv %s1668
    %v1777 = vadd.f32 %v1775, %v1776
    %v1778 = vmul.f32 %v1762, %v1777
    %v1779 = vadd.f32 %v1773, %v1778
    %v1780 = vtanh.pop %v1779
    %v1781 = vsub.f32 0.0, %v1780
    %v1782 = vmul.f32 %v1772, %v1781
    %v1783 = vadd.f32 %v1780, %v1782
    %vm1784 = vcmask 57344
    %1785 = vst.msk [vmem:[#allocation12] sm:$0x1] %vm1784, %v1783
    %v1786 = vld [vmem:[#allocation9 + $0x1] sm:$0x1]
    %v1787 = vmul.f32 %v1783, %v1754
    %v1788 = vadd.f32 %v1786, %v1787
    %v1789 = vxor.u32 %v1788, 2147483648
    %v1790 = vmul.f32 %v1789, 1.442695
    %v1791 = vpow.pop %v1790
    %v1792 = vadd.f32 %v1791, 1.0
    %v1793 = vrcp.pop %v1792
    %v1794 = vmul.f32 1.0, %v1793
    %v1795 = vld [vmem:[#allocation10 + $0x1] sm:$0x1]
    %v1796 = vmul.f32 %v1783, %v1764
    %v1797 = vadd.f32 %v1795, %v1796
    %v1798 = vxor.u32 %v1797, 2147483648
    %v1799 = vmul.f32 %v1798, 1.442695
    %v1800 = vpow.pop %v1799
    %v1801 = vadd.f32 %v1800, 1.0
    %v1802 = vrcp.pop %v1801
    %v1803 = vmul.f32 1.0, %v1802
    %v1804 = vld [vmem:[#allocation11 + $0x1] sm:$0x1]
    %v1805 = vmul.f32 %v1783, %v1774
    %v1806 = vadd.f32 %v1805, %v1776
    %v1807 = vmul.f32 %v1794, %v1806
    %v1808 = vadd.f32 %v1804, %v1807
    %v1809 = vtanh.pop %v1808
    %v1810 = vsub.f32 %v1783, %v1809
    %v1811 = vmul.f32 %v1803, %v1810
    %v1812 = vadd.f32 %v1809, %v1811
    %1813 = vst.msk [vmem:[#allocation12 + $0x1] sm:$0x1] %vm1784, %v1812
    %v1814 = vld [vmem:[#allocation12] sm:$0x3]
    %v1815 = vpack.c.bf16 %v1814, %v1814
    %v1816 = vld [vmem:[%s11] sm:$0xf]
    %v1817 = vld [vmem:[%s12] sm:$0x1]
    %v1819 = vlaneseq
    %v1820 = vshrl.u32 %v1819, 7
    %v1821 = vsub.s32 0, %v1820
    %v1822 = vrot.slane %v1817, %v1821
    %vm1824 = vcmask 64512
    %v1826 = vsel %vm1824, %v1815, 0
    %v1829 = vsel %vm194, %v1816, 0
    %1831 = vmatprep.subr.bf16.mxu0 0
    %1832 = vmatpush1.bf16.msra.mxu0 0
    %1833 = vmatprep.subr.bf16.mxu0 0
    %1834 = vmatpush1.bf16.msra.mxu0 0
    %1835 = vmatprep.subr.bf16.mxu0 0
    %1836 = vmatpush1.bf16.msra.mxu0 0
    %1837 = vmatprep.subr.bf16.mxu0 0
    %1838 = vmatpush1.bf16.msra.mxu0 0
    %1839 = vmatprep.subr.bf16.mxu0 0
    %1840 = vmatpush1.bf16.msra.mxu0 0
    %1841 = vmatprep.subr.bf16.mxu0 0
    %1842 = vmatpush1.bf16.msra.mxu0 0
    %1843 = vmatprep.subr.bf16.mxu0 0
    %1844 = vmatpush1.bf16.msra.mxu0 0
    %1845 = vmatprep.subr.bf16.mxu0 0
    %1846 = vmatpush1.bf16.msra.mxu0 %v1829
    %1847 = vmatprep.subr.bf16.mxu0 0
    %1848 = vmatpush2.bf16.msra.mxu0 0
    %1849 = vmatprep.subr.bf16.mxu0 0
    %1850 = vmatpush2.bf16.msra.mxu0 0
    %1851 = vmatprep.subr.bf16.mxu0 0
    %1852 = vmatpush2.bf16.msra.mxu0 0
    %1853 = vmatprep.subr.bf16.mxu0 0
    %1854 = vmatpush2.bf16.msra.mxu0 0
    %1855 = vmatprep.subr.bf16.mxu0 0
    %1856 = vmatpush2.bf16.msra.mxu0 0
    %1857 = vmatprep.subr.bf16.mxu0 0
    %1858 = vmatpush2.bf16.msra.mxu0 0
    %1859 = vmatprep.subr.bf16.mxu0 0
    %1860 = vmatpush2.bf16.msra.mxu0 0
    %1861 = vmatprep.subr.bf16.mxu0 0
    %1862 = vmatpush2.bf16.msra.mxu0 0
    %1863 = vmatprep.mubr.bf16.mxu0 0
    %1864 = vmatmul.mubr.bf16.gmra.mxu0 %v1826
    %v1865 = vpop.f32.mrf.mxu0
    %v1866 = vadd.f32 %v1822, %v1865
    %v1867 = vpop.f32.mrf.mxu0
    %v1868 = vpop.f32.mrf.mxu0
    %v1869 = vpop.f32.mrf.mxu0
    %1870 = vdwg.mxu0
    %v1871 = vtanh.pop %v1866
    %vm1872 = vcmask 123904
    %1873 = vst.msk [vmem:[%s13] sm:$0x3] %vm1872, %v1871
    // Predicated region
    $region82: #{forward.1} parent=1 // pred_check
      _
    $region83: #{forward.1} parent=1 // pred_check_branch
      %1875 = sbr.rel (0) target = $region85
    $region84: #{forward.1} parent=1 // pred_region
      _
    $region85: #{forward.1} parent=1 // pred_fallthru
      _
    // Predicated region
    $region86: #{forward.1} parent=1 // pred_check
      _
    $region87: #{forward.1} parent=1 // pred_check_branch
      %1877 = sbr.rel (0) target = $region89
    $region88: #{forward.1} parent=1 // pred_region
      _
    $region89: #{forward.1} parent=1 // pred_fallthru
      _
    %1878 = vsyncpa [#allocation14], 1
    %1879 = vsyncpa [#allocation17], 1
    %1880 = vsyncpa [#allocation20], 1
    %1881 = vsyncpa [#allocation23], 1
    %1882 = vsyncpa [#allocation15], 1
  %1883 = vsyncmov [#allocation4]
  %s1884 = vpop.sfrf %1883
  %p1885 = scmp.eq.s32.totalorder %s1884, 0
  %p1886 = pneg %p1885
  %1888 = shalt.err (%p1886)
  %s1889 = scalar_lea.sflag [#allocation4], 1
  %1890 = vsyncmov %s1889
  %s1891 = vpop.sfrf %1890
  %p1892 = scmp.eq.s32.totalorder %s1891, 0
  %p1893 = pneg %p1892
  %1895 = shalt.err (%p1893)

</llo_original>
